<compile_context>
chip_gen: v5e
topology: v5e:2x2
jax: 0.10.0
libtpu: 0.0.40
codegen_flags: <defaults>
</compile_context>

<pallas_src>
import numpy as np
import jax
import jax.numpy as jnp
from jax.experimental import pallas as pl
from jax.experimental.pallas import tpu as pltpu

LEAKY_SLOPE = 0.2   # nn.LeakyReLU(0.2) everywhere in the DDN spec
BN_EPS = 1e-5


def _leaky(v):
    return jnp.where(v >= 0, v, LEAKY_SLOPE * v)


# ---------------------------------------------------------------------------
# The single fused Pallas kernel
# ---------------------------------------------------------------------------
def ddn_fused_kernel(x_ref, w1_ref, b1_ref, w2_ref, b2_ref, wl_ref, bl_ref,
                     wc_ref, bc_ref, m0_ref, c0_ref, m1_ref, c1_ref,
                     m2_ref, c2_ref, out_ref):
    """Whole DDN eval forward in one kernel, everything resident in VMEM.

       x (B, cond) -> encoder (2x Linear+LeakyReLU) -> latent (Linear+LeakyReLU)
                   -> conv_linears (1x1 Conv == Linear, +LeakyReLU)
                   -> 3 folded DeconvEstimator stages (dense matmul + bias [+LeakyReLU])
                   -> log_softmax over bins."""

    def lin(v, w_ref, b_ref):
        return jnp.dot(v, w_ref[...], preferred_element_type=jnp.float32) + b_ref[...]

    x = x_ref[...]                                   # (B, cond)
    h = _leaky(lin(x, w1_ref, b1_ref))               # encoder layer 1   (B, hidden)
    h = _leaky(lin(h, w2_ref, b2_ref))               # encoder layer 2   (B, hidden)
    z = _leaky(lin(h, wl_ref, bl_ref))               # latent layer      (B, codes)
    y = _leaky(lin(z, wc_ref, bc_ref))               # conv_linears      (B, channels*width)

    a = _leaky(lin(y, m0_ref, c0_ref))               # stage 0 folded    (B, 512)
    a = _leaky(lin(a, m1_ref, c1_ref))               # stage 1 folded    (B, 1024)
    logits = lin(a, m2_ref, c2_ref)                  # stage 2 folded    (B, num_bins)

    m = jnp.max(logits, axis=-1, keepdims=True)      # log_softmax epilogue
    s = jnp.sum(jnp.exp(logits - m), axis=-1, keepdims=True)
    out_ref[...] = logits - m - jnp.log(s)


def ddn_forward(params, x):
    """DDN.forward for target_dim == 1, disable_vl=True, eval mode -> log_mass (B,1,num_bins)."""
    b = x.shape[0]
    num_bins = params["c2"].shape[-1]
    vmem = lambda: pl.BlockSpec(memory_space=pltpu.MemorySpace.VMEM)
    log_mass = pl.pallas_call(
        ddn_fused_kernel,
        out_shape=jax.ShapeDtypeStruct((b, num_bins), jnp.float32),
        in_specs=[vmem() for _ in range(15)],
        out_specs=vmem(),
    )(x,
      params["w1"], params["b1"], params["w2"], params["b2"],
      params["wl"], params["bl"], params["wc"], params["bc"],
      params["m0"], params["c0"], params["m1"], params["c1"],
      params["m2"], params["c2"])
    # glue reshape only: (B, num_bins) -> (B, target_dim=1, num_bins)
    return log_mass.reshape(b, 1, num_bins)


# ---------------------------------------------------------------------------
# Host-side parameter construction & stage folding
# ---------------------------------------------------------------------------
def upsample_linear_matrix(l_in, scale):
    """U (l_in, l_in*scale) reproducing nn.Upsample(scale, 'linear', align_corners=False)
    as x_up = x @ U (applied along the spatial axis)."""
    l_out = l_in * scale
    i = np.arange(l_out)
    real = (i + 0.5) / scale - 0.5
    real = np.maximum(real, 0.0)
    idx0 = np.minimum(np.floor(real).astype(np.int64), l_in - 1)
    idx1 = np.minimum(idx0 + 1, l_in - 1)
    lam1 = (real - idx0).astype(np.float32)
    lam0 = (1.0 - lam1).astype(np.float32)
    u = np.zeros((l_in, l_out), dtype=np.float32)
    u[idx0, i] += lam0
    u[idx1, i] += lam1
    return u


def fold_stage(U, W, b, gamma=None, beta=None, mean=None, var=None):
    """Fold Upsample (matrix U) + Conv1d(k=3, pad=1) + eval BatchNorm into a single
    dense matrix M (C_in*L_in, C_out*L_out) and bias (1, C_out*L_out):
        out_flat = x_flat @ M + bias,  x_flat laid out as (ci*L_in + li)."""
    L_in, L_out = U.shape
    C_out, C_in, K = W.shape
    if gamma is not None:
        scale = (gamma / np.sqrt(var + BN_EPS)).astype(np.float32)        # gamma/sqrt(var+eps)
        shift = (beta - mean * scale).astype(np.float32)                  # beta - mean*scale
    else:                                                                 # final stage: no BN
        scale = np.ones((C_out,), np.float32)
        shift = np.zeros((C_out,), np.float32)

    Upad = np.zeros((L_in, L_out + 2), np.float32)
    Upad[:, 1:L_out + 1] = U
    M = np.zeros((C_in, L_in, C_out, L_out), np.float32)
    for k in range(K):
        Uk = Upad[:, k:k + L_out]                                         # U[:, lo+k-1], edge-zeroed
        M += W[:, :, k].T[:, None, :, None] * Uk[None, :, None, :]
    M = M * scale[None, None, :, None]
    bias = (b * scale + shift).astype(np.float32)
    return (M.reshape(C_in * L_in, C_out * L_out).astype(np.float32),
            np.repeat(bias, L_out)[None, :].astype(np.float32))


def init_params(key, *, condition_dim, hidden, codes, channels, width,
                est_channels, scale_factor):
    keys = jax.random.split(key, 64)
    it = iter(keys)

    def randn(shape, scale=1.0):
        return (np.asarray(jax.random.normal(next(it), shape, jnp.float32)) * scale
                ).astype(np.float32)

    def randu(shape, lo, hi):
        return np.asarray(
            jax.random.uniform(next(it), shape, jnp.float32, lo, hi)).astype(np.float32)

    raw = {
        "channels": channels, "width": width,
        # BaseMLP encoder (2 Linear layers + LeakyReLU(0.2))
        "w1": randn((condition_dim, hidden), 1.0 / np.sqrt(condition_dim)),
        "b1": randn((1, hidden), 0.05),
        "w2": randn((hidden, hidden), 1.0 / np.sqrt(hidden)),
        "b2": randn((1, hidden), 0.05),
        # latent_layer (disable_vl=True): Linear(hidden, codes) + LeakyReLU(0.2)
        "wl": randn((hidden, codes), 1.0 / np.sqrt(hidden)),
        "bl": randn((1, codes), 0.05),
        # conv_linears: Conv1d(codes, width*channels, k=1) == Linear, + LeakyReLU(0.2)
        "wc": randn((codes, width * channels), 1.0 / np.sqrt(codes)),
        "bc": randn((1, width * channels), 0.05),
        "stages": [],
    }

    # DeconvEstimator stages (raw params kept for the pure-JAX reference check).
    ch = [channels] + list(est_channels)
    l_in = width
    for i in range(len(ch) - 1):
        c_in, c_out = ch[i], ch[i + 1]
        raw["stages"].append({
            "U": upsample_linear_matrix(l_in, scale_factor),
            "W": randn((c_out, c_in, 3), 1.0 / np.sqrt(c_in * 3)),
            "b": randn((c_out,), 0.05),
            "gamma": randu((c_out,), 0.5, 1.5),
            "beta": randn((c_out,), 0.1),
            "mean": randn((c_out,), 0.1),
            "var": randu((c_out,), 0.5, 1.5),
            "has_bn": True,
        })
        l_in *= scale_factor
    # final: Upsample + Conv1d(ch[-1] -> 1, k=3) -- no BN, no activation
    raw["stages"].append({
        "U": upsample_linear_matrix(l_in, scale_factor),
        "W": randn((1, ch[-1], 3), 1.0 / np.sqrt(ch[-1] * 3)),
        "b": randn((1,), 0.05),
        "has_bn": False,
    })

    # Fold stages into dense matmuls for the kernel.
    params = {k: jnp.asarray(raw[k]) for k in
              ("w1", "b1", "w2", "b2", "wl", "bl", "wc", "bc")}
    for i, st in enumerate(raw["stages"]):
        if st["has_bn"]:
            M, c = fold_stage(st["U"], st["W"], st["b"],
                              st["gamma"], st["beta"], st["mean"], st["var"])
        else:
            M, c = fold_stage(st["U"], st["W"], st["b"])
        params[f"m{i}"] = jnp.asarray(M)
        params[f"c{i}"] = jnp.asarray(c)
    return params, raw


# ---------------------------------------------------------------------------
# Pure-JAX reference (unfused math) for a numerical cross-check
# ---------------------------------------------------------------------------
def ddn_reference(raw, x):
    h = _leaky(x @ jnp.asarray(raw["w1"]) + jnp.asarray(raw["b1"]))
    h = _leaky(h @ jnp.asarray(raw["w2"]) + jnp.asarray(raw["b2"]))
    z = _leaky(h @ jnp.asarray(raw["wl"]) + jnp.asarray(raw["bl"]))
    y = _leaky(z @ jnp.asarray(raw["wc"]) + jnp.asarray(raw["bc"]))
    b = x.shape[0]
    y = y.reshape(b, raw["channels"], raw["width"])           # NCL, like .view in PyTorch
    for st in raw["stages"]:
        U = jnp.asarray(st["U"])
        up = jnp.einsum("bcl,lm->bcm", y, U)                  # Upsample(linear, align_corners=False)
        l_out = up.shape[-1]
        up_pad = jnp.pad(up, ((0, 0), (0, 0), (1, 1)))        # Conv1d padding=1
        W = jnp.asarray(st["W"])
        out = sum(jnp.einsum("bcm,oc->bom", up_pad[:, :, k:k + l_out], W[:, :, k])
                  for k in range(3))
        out = out + jnp.asarray(st["b"])[None, :, None]
        if st["has_bn"]:
            scale = st["gamma"] / np.sqrt(st["var"] + BN_EPS)
            shift = st["beta"] - st["mean"] * scale
            out = out * jnp.asarray(scale)[None, :, None] + jnp.asarray(shift)[None, :, None]
            out = _leaky(out)
        y = out
    return jax.nn.log_softmax(y, axis=-1)                     # (B, 1, num_bins)


# ---------------------------------------------------------------------------
if __name__ == "__main__":
    B = 2
    condition_dim = 8
    hidden = 32
    codes = 16
    channels = 4
    width = 4
    est_channels = [32, 16]
    scale_factor = 4
    num_bins = width * scale_factor ** (len(est_channels) + 1)   # 256

    params, raw = init_params(jax.random.PRNGKey(42),
                              condition_dim=condition_dim, hidden=hidden, codes=codes,
                              channels=channels, width=width,
                              est_channels=est_channels, scale_factor=scale_factor)

    x = jax.random.normal(jax.random.PRNGKey(0), (B, condition_dim), jnp.float32)
    # targets are unused in the eval forward when target_dim == 1.

    log_mass = jax.block_until_ready(ddn_forward(params, x))

    assert log_mass.shape == (B, 1, num_bins), log_mass.shape
    assert bool(jnp.all(jnp.isfinite(log_mass)))
    total_prob = jnp.sum(jnp.exp(log_mass), axis=-1)
    assert bool(jnp.all(jnp.abs(total_prob - 1.0) < 1e-4))

    ref = jax.block_until_ready(ddn_reference(raw, x))
    assert bool(jnp.all(jnp.abs(log_mass - ref) < 2e-4)), float(jnp.max(jnp.abs(log_mass - ref)))

    print("KERNEL_OK")
</pallas_src>

<mosaic_0001>
module attributes {stable_mosaic.version = 11 : i64} {
  func.func @ddn_fused_kernel(%arg0: memref<2x8xf32, #tpu.memory_space<vmem>>, %arg1: memref<8x32xf32, #tpu.memory_space<vmem>>, %arg2: memref<1x32xf32, #tpu.memory_space<vmem>>, %arg3: memref<32x32xf32, #tpu.memory_space<vmem>>, %arg4: memref<1x32xf32, #tpu.memory_space<vmem>>, %arg5: memref<32x16xf32, #tpu.memory_space<vmem>>, %arg6: memref<1x16xf32, #tpu.memory_space<vmem>>, %arg7: memref<16x16xf32, #tpu.memory_space<vmem>>, %arg8: memref<1x16xf32, #tpu.memory_space<vmem>>, %arg9: memref<16x512xf32, #tpu.memory_space<vmem>>, %arg10: memref<1x512xf32, #tpu.memory_space<vmem>>, %arg11: memref<512x1024xf32, #tpu.memory_space<vmem>>, %arg12: memref<1x1024xf32, #tpu.memory_space<vmem>>, %arg13: memref<1024x256xf32, #tpu.memory_space<vmem>>, %arg14: memref<1x256xf32, #tpu.memory_space<vmem>>, %arg15: memref<2x256xf32, #tpu.memory_space<vmem>>) attributes {dimension_semantics = [], scalar_prefetch = 0 : i64, scratch_operands = 0 : i64, tpu.core_type = #tpu.core_type<tc>} {
    %c0 = arith.constant 0 : index
    %c0_0 = arith.constant 0 : index
    %0 = vector.load %arg0[%c0, %c0_0] : memref<2x8xf32, #tpu.memory_space<vmem>>, vector<2x8xf32>
    %c0_1 = arith.constant 0 : index
    %c0_2 = arith.constant 0 : index
    %1 = vector.load %arg1[%c0_1, %c0_2] : memref<8x32xf32, #tpu.memory_space<vmem>>, vector<8x32xf32>
    %cst = arith.constant dense<0.000000e+00> : vector<2x32xf32>
    %2 = tpu.matmul %0, %1, %cst {dimension_numbers = #tpu.dot_dimension_numbers<[1], [0], [0], [1], [0, 0, 1, 1], [], []>} : vector<2x8xf32>, vector<8x32xf32>, vector<2x32xf32> -> vector<2x32xf32>
    %c0_3 = arith.constant 0 : index
    %c0_4 = arith.constant 0 : index
    %3 = vector.load %arg2[%c0_3, %c0_4] : memref<1x32xf32, #tpu.memory_space<vmem>>, vector<1x32xf32>
    %4 = vector.broadcast %3 : vector<1x32xf32> to vector<2x32xf32>
    %5 = arith.addf %2, %4 : vector<2x32xf32>
    %cst_5 = arith.constant 0.000000e+00 : f32
    %6 = vector.broadcast %cst_5 : f32 to vector<2x32xf32>
    %7 = arith.cmpf oge, %5, %6 : vector<2x32xf32>
    %cst_6 = arith.constant 2.000000e-01 : f32
    %8 = vector.broadcast %cst_6 : f32 to vector<2x32xf32>
    %9 = arith.mulf %8, %5 : vector<2x32xf32>
    %10 = arith.select %7, %5, %9 : vector<2x32xi1>, vector<2x32xf32>
    %c0_7 = arith.constant 0 : index
    %c0_8 = arith.constant 0 : index
    %11 = vector.load %arg3[%c0_7, %c0_8] : memref<32x32xf32, #tpu.memory_space<vmem>>, vector<32x32xf32>
    %cst_9 = arith.constant dense<0.000000e+00> : vector<2x32xf32>
    %12 = tpu.matmul %10, %11, %cst_9 {dimension_numbers = #tpu.dot_dimension_numbers<[1], [0], [0], [1], [0, 0, 1, 1], [], []>} : vector<2x32xf32>, vector<32x32xf32>, vector<2x32xf32> -> vector<2x32xf32>
    %c0_10 = arith.constant 0 : index
    %c0_11 = arith.constant 0 : index
    %13 = vector.load %arg4[%c0_10, %c0_11] : memref<1x32xf32, #tpu.memory_space<vmem>>, vector<1x32xf32>
    %14 = vector.broadcast %13 : vector<1x32xf32> to vector<2x32xf32>
    %15 = arith.addf %12, %14 : vector<2x32xf32>
    %cst_12 = arith.constant 0.000000e+00 : f32
    %16 = vector.broadcast %cst_12 : f32 to vector<2x32xf32>
    %17 = arith.cmpf oge, %15, %16 : vector<2x32xf32>
    %cst_13 = arith.constant 2.000000e-01 : f32
    %18 = vector.broadcast %cst_13 : f32 to vector<2x32xf32>
    %19 = arith.mulf %18, %15 : vector<2x32xf32>
    %20 = arith.select %17, %15, %19 : vector<2x32xi1>, vector<2x32xf32>
    %c0_14 = arith.constant 0 : index
    %c0_15 = arith.constant 0 : index
    %21 = vector.load %arg5[%c0_14, %c0_15] : memref<32x16xf32, #tpu.memory_space<vmem>>, vector<32x16xf32>
    %cst_16 = arith.constant dense<0.000000e+00> : vector<2x16xf32>
    %22 = tpu.matmul %20, %21, %cst_16 {dimension_numbers = #tpu.dot_dimension_numbers<[1], [0], [0], [1], [0, 0, 1, 1], [], []>} : vector<2x32xf32>, vector<32x16xf32>, vector<2x16xf32> -> vector<2x16xf32>
    %c0_17 = arith.constant 0 : index
    %c0_18 = arith.constant 0 : index
    %23 = vector.load %arg6[%c0_17, %c0_18] : memref<1x16xf32, #tpu.memory_space<vmem>>, vector<1x16xf32>
    %24 = vector.broadcast %23 : vector<1x16xf32> to vector<2x16xf32>
    %25 = arith.addf %22, %24 : vector<2x16xf32>
    %cst_19 = arith.constant 0.000000e+00 : f32
    %26 = vector.broadcast %cst_19 : f32 to vector<2x16xf32>
    %27 = arith.cmpf oge, %25, %26 : vector<2x16xf32>
    %cst_20 = arith.constant 2.000000e-01 : f32
    %28 = vector.broadcast %cst_20 : f32 to vector<2x16xf32>
    %29 = arith.mulf %28, %25 : vector<2x16xf32>
    %30 = arith.select %27, %25, %29 : vector<2x16xi1>, vector<2x16xf32>
    %c0_21 = arith.constant 0 : index
    %c0_22 = arith.constant 0 : index
    %31 = vector.load %arg7[%c0_21, %c0_22] : memref<16x16xf32, #tpu.memory_space<vmem>>, vector<16x16xf32>
    %cst_23 = arith.constant dense<0.000000e+00> : vector<2x16xf32>
    %32 = tpu.matmul %30, %31, %cst_23 {dimension_numbers = #tpu.dot_dimension_numbers<[1], [0], [0], [1], [0, 0, 1, 1], [], []>} : vector<2x16xf32>, vector<16x16xf32>, vector<2x16xf32> -> vector<2x16xf32>
    %c0_24 = arith.constant 0 : index
    %c0_25 = arith.constant 0 : index
    %33 = vector.load %arg8[%c0_24, %c0_25] : memref<1x16xf32, #tpu.memory_space<vmem>>, vector<1x16xf32>
    %34 = vector.broadcast %33 : vector<1x16xf32> to vector<2x16xf32>
    %35 = arith.addf %32, %34 : vector<2x16xf32>
    %cst_26 = arith.constant 0.000000e+00 : f32
    %36 = vector.broadcast %cst_26 : f32 to vector<2x16xf32>
    %37 = arith.cmpf oge, %35, %36 : vector<2x16xf32>
    %cst_27 = arith.constant 2.000000e-01 : f32
    %38 = vector.broadcast %cst_27 : f32 to vector<2x16xf32>
    %39 = arith.mulf %38, %35 : vector<2x16xf32>
    %40 = arith.select %37, %35, %39 : vector<2x16xi1>, vector<2x16xf32>
    %c0_28 = arith.constant 0 : index
    %c0_29 = arith.constant 0 : index
    %41 = vector.load %arg9[%c0_28, %c0_29] : memref<16x512xf32, #tpu.memory_space<vmem>>, vector<16x512xf32>
    %cst_30 = arith.constant dense<0.000000e+00> : vector<2x512xf32>
    %42 = tpu.matmul %40, %41, %cst_30 {dimension_numbers = #tpu.dot_dimension_numbers<[1], [0], [0], [1], [0, 0, 1, 1], [], []>} : vector<2x16xf32>, vector<16x512xf32>, vector<2x512xf32> -> vector<2x512xf32>
    %c0_31 = arith.constant 0 : index
    %c0_32 = arith.constant 0 : index
    %43 = vector.load %arg10[%c0_31, %c0_32] : memref<1x512xf32, #tpu.memory_space<vmem>>, vector<1x512xf32>
    %44 = vector.broadcast %43 : vector<1x512xf32> to vector<2x512xf32>
    %45 = arith.addf %42, %44 : vector<2x512xf32>
    %cst_33 = arith.constant 0.000000e+00 : f32
    %46 = vector.broadcast %cst_33 : f32 to vector<2x512xf32>
    %47 = arith.cmpf oge, %45, %46 : vector<2x512xf32>
    %cst_34 = arith.constant 2.000000e-01 : f32
    %48 = vector.broadcast %cst_34 : f32 to vector<2x512xf32>
    %49 = arith.mulf %48, %45 : vector<2x512xf32>
    %50 = arith.select %47, %45, %49 : vector<2x512xi1>, vector<2x512xf32>
    %c0_35 = arith.constant 0 : index
    %c0_36 = arith.constant 0 : index
    %51 = vector.load %arg11[%c0_35, %c0_36] : memref<512x1024xf32, #tpu.memory_space<vmem>>, vector<512x1024xf32>
    %cst_37 = arith.constant dense<0.000000e+00> : vector<2x1024xf32>
    %52 = tpu.matmul %50, %51, %cst_37 {dimension_numbers = #tpu.dot_dimension_numbers<[1], [0], [0], [1], [0, 0, 1, 1], [], []>} : vector<2x512xf32>, vector<512x1024xf32>, vector<2x1024xf32> -> vector<2x1024xf32>
    %c0_38 = arith.constant 0 : index
    %c0_39 = arith.constant 0 : index
    %53 = vector.load %arg12[%c0_38, %c0_39] : memref<1x1024xf32, #tpu.memory_space<vmem>>, vector<1x1024xf32>
    %54 = vector.broadcast %53 : vector<1x1024xf32> to vector<2x1024xf32>
    %55 = arith.addf %52, %54 : vector<2x1024xf32>
    %cst_40 = arith.constant 0.000000e+00 : f32
    %56 = vector.broadcast %cst_40 : f32 to vector<2x1024xf32>
    %57 = arith.cmpf oge, %55, %56 : vector<2x1024xf32>
    %cst_41 = arith.constant 2.000000e-01 : f32
    %58 = vector.broadcast %cst_41 : f32 to vector<2x1024xf32>
    %59 = arith.mulf %58, %55 : vector<2x1024xf32>
    %60 = arith.select %57, %55, %59 : vector<2x1024xi1>, vector<2x1024xf32>
    %c0_42 = arith.constant 0 : index
    %c0_43 = arith.constant 0 : index
    %61 = vector.load %arg13[%c0_42, %c0_43] : memref<1024x256xf32, #tpu.memory_space<vmem>>, vector<1024x256xf32>
    %cst_44 = arith.constant dense<0.000000e+00> : vector<2x256xf32>
    %62 = tpu.matmul %60, %61, %cst_44 {dimension_numbers = #tpu.dot_dimension_numbers<[1], [0], [0], [1], [0, 0, 1, 1], [], []>} : vector<2x1024xf32>, vector<1024x256xf32>, vector<2x256xf32> -> vector<2x256xf32>
    %c0_45 = arith.constant 0 : index
    %c0_46 = arith.constant 0 : index
    %63 = vector.load %arg14[%c0_45, %c0_46] : memref<1x256xf32, #tpu.memory_space<vmem>>, vector<1x256xf32>
    %64 = vector.broadcast %63 : vector<1x256xf32> to vector<2x256xf32>
    %65 = arith.addf %62, %64 : vector<2x256xf32>
    %cst_47 = arith.constant dense<0xFF800000> : vector<2xf32>
    %66 = vector.multi_reduction <maximumf>, %65, %cst_47 [1] : vector<2x256xf32> to vector<2xf32>
    %67 = vector.shape_cast %66 : vector<2xf32> to vector<2x1xf32>
    %68 = vector.broadcast %67 : vector<2x1xf32> to vector<2x256xf32>
    %69 = arith.subf %65, %68 : vector<2x256xf32>
    %70 = math.exp %69 : vector<2x256xf32>
    %cst_48 = arith.constant dense<0.000000e+00> : vector<2xf32>
    %71 = vector.multi_reduction <add>, %70, %cst_48 [1] : vector<2x256xf32> to vector<2xf32>
    %72 = vector.shape_cast %71 : vector<2xf32> to vector<2x1xf32>
    %73 = vector.broadcast %67 : vector<2x1xf32> to vector<2x256xf32>
    %74 = arith.subf %65, %73 : vector<2x256xf32>
    %75 = math.log %72 : vector<2x1xf32>
    %76 = vector.broadcast %75 : vector<2x1xf32> to vector<2x256xf32>
    %77 = arith.subf %74, %76 : vector<2x256xf32>
    %c0_49 = arith.constant 0 : index
    %c0_50 = arith.constant 0 : index
    %78 = vector.load %arg15[%c0_49, %c0_50] : memref<2x256xf32, #tpu.memory_space<vmem>>, vector<2x256xf32>
    tpu.vector_store %arg15[%c0_49, %c0_50], %77 {strides = array<i32>} : memref<2x256xf32, #tpu.memory_space<vmem>>, vector<2x256xf32>,
    return
  }
}

</mosaic_0001>

<llo_original>
// kernel: tpu_custom_call.1
$region0: #{tpu_custom_call.1}
  #allocation0 [shape = 'u32[]', space=smem, size = 0x4, offset = 0x4, fixed_abs, tag = 'smem constant byte address 0x4 - core index']
  #allocation1 [shape = 'u32[72,128]{1,0:T(1,128)}', space=vmem, size = 0x9000, scoped, tag = 'internal scratch']
  %s0 = inlined_call_operand.hbm [shape: f32[2,8], index: 0, kind: input, shape index: {}]
  %s1 = inlined_call_operand.hbm [shape: f32[8,32], index: 1, kind: input, shape index: {}]
  %s2 = inlined_call_operand.hbm [shape: f32[1,32], index: 2, kind: input, shape index: {}]
  %s3 = inlined_call_operand.hbm [shape: f32[32,32], index: 3, kind: input, shape index: {}]
  %s4 = inlined_call_operand.hbm [shape: f32[1,32], index: 4, kind: input, shape index: {}]
  %s5 = inlined_call_operand.vmem [shape: f32[32,16], index: 5, kind: input, shape index: {}]
  %s6 = inlined_call_operand.hbm [shape: f32[1,16], index: 6, kind: input, shape index: {}]
  %s7 = inlined_call_operand.hbm [shape: f32[16,16], index: 7, kind: input, shape index: {}]
  %s8 = inlined_call_operand.hbm [shape: f32[1,16], index: 8, kind: input, shape index: {}]
  %s9 = inlined_call_operand.hbm [shape: f32[16,512], index: 9, kind: input, shape index: {}]
  %s10 = inlined_call_operand.hbm [shape: f32[1,512], index: 10, kind: input, shape index: {}]
  %s11 = inlined_call_operand.hbm [shape: f32[512,1024], index: 11, kind: input, shape index: {}]
  %s12 = inlined_call_operand.hbm [shape: f32[1,1024], index: 12, kind: input, shape index: {}]
  %s13 = inlined_call_operand.hbm [shape: f32[1024,256], index: 13, kind: input, shape index: {}]
  %s14 = inlined_call_operand.hbm [shape: f32[1,256], index: 14, kind: input, shape index: {}]
  %s15 = inlined_call_operand.hbm [shape: f32[2,256], index: 15, kind: output, shape index: {}]
  %s16 = sld [smem:[#allocation0]]
  $region126: #{tpu_custom_call.1} parent=0
    _
  %s18 = ssub.s32 1, %s16
  %s19 = scalar_select 0, %s18, %s16
  $region1: #{tpu_custom_call.1} parent=0
    #allocation2 [shape = 'u8[1024]{0}', space=vmem, size = 0x400, scoped, tag = 'input window, operand 0, single buffered']
    #allocation3 [shape = 's32[1]{0}', space=sflag, size = 0x4, scoped, tag = 'scoped memory for tpu_custom_call.1']
    #allocation4 [shape = 's32[1]{0}', space=sflag, size = 0x4, scoped, tag = 'scoped memory for tpu_custom_call.1']
    #allocation5 [shape = 'u8[4096]{0}', space=vmem, size = 0x1000, scoped, tag = 'input window, operand 1, single buffered']
    #allocation6 [shape = 's32[1]{0}', space=sflag, size = 0x4, scoped, tag = 'scoped memory for tpu_custom_call.1']
    #allocation7 [shape = 'u8[512]{0}', space=vmem, size = 0x400, scoped, tag = 'input window, operand 2, single buffered']
    #allocation8 [shape = 'u8[16384]{0}', space=vmem, size = 0x4000, scoped, tag = 'input window, operand 3, single buffered']
    #allocation9 [shape = 's32[1]{0}', space=sflag, size = 0x4, scoped, tag = 'scoped memory for tpu_custom_call.1']
    #allocation10 [shape = 'u8[512]{0}', space=vmem, size = 0x400, scoped, tag = 'input window, operand 4, single buffered']
    #allocation11 [shape = 'u8[512]{0}', space=vmem, size = 0x400, scoped, tag = 'input window, operand 6, single buffered']
    #allocation12 [shape = 's32[1]{0}', space=sflag, size = 0x4, scoped, tag = 'scoped memory for tpu_custom_call.1']
    #allocation13 [shape = 'u8[8192]{0}', space=vmem, size = 0x2000, scoped, tag = 'input window, operand 7, single buffered']
    #allocation14 [shape = 'u8[512]{0}', space=vmem, size = 0x400, scoped, tag = 'input window, operand 8, single buffered']
    #allocation15 [shape = 's32[1]{0}', space=sflag, size = 0x4, scoped, tag = 'scoped memory for tpu_custom_call.1']
    #allocation16 [shape = 'u8[32768]{0}', space=vmem, size = 0x8000, scoped, tag = 'input window, operand 9, single buffered']
    #allocation17 [shape = 'u8[2048]{0}', space=vmem, size = 0x800, scoped, tag = 'input window, operand 10, single buffered']
    #allocation18 [shape = 's32[1]{0}', space=sflag, size = 0x4, scoped, tag = 'scoped memory for tpu_custom_call.1']
    #allocation19 [shape = 'u8[2097152]{0}', space=vmem, size = 0x200000, scoped, tag = 'input window, operand 11, single buffered']
    #allocation20 [shape = 'u8[4096]{0}', space=vmem, size = 0x1000, scoped, tag = 'input window, operand 12, single buffered']
    #allocation21 [shape = 's32[1]{0}', space=sflag, size = 0x4, scoped, tag = 'scoped memory for tpu_custom_call.1']
    #allocation22 [shape = 'u8[1048576]{0}', space=vmem, size = 0x100000, scoped, tag = 'input window, operand 13, single buffered']
    #allocation23 [shape = 'u8[1024]{0}', space=vmem, size = 0x400, scoped, tag = 'input window, operand 14, single buffered']
    #allocation24 [shape = 's32[1]{0}', space=sflag, size = 0x4, scoped, tag = 'scoped memory for tpu_custom_call.1']
    #allocation25 [shape = 'u8[2048]{0}', space=vmem, size = 0x800, scoped, tag = 'output window, operand 0, single buffered']
    %20 = vsyncpa [#allocation3], 0
    %21 = vsyncpa [#allocation6], 0
    %22 = vsyncpa [#allocation9], 0
    %23 = vsyncpa [#allocation12], 0
    %24 = vsyncpa [#allocation15], 0
    %25 = vsyncpa [#allocation18], 0
    %26 = vsyncpa [#allocation21], 0
    %27 = vsyncpa [#allocation24], 0
    %28 = vsyncpa [#allocation4], 0
    // Predicated region
    $region2: #{tpu_custom_call.1} parent=1 // pred_check
      _
    $region3: #{tpu_custom_call.1} parent=1 // pred_check_branch
      %30 = sbr.rel (0) target = $region5
    $region4: #{tpu_custom_call.1} parent=1 // pred_region
      %32 = vsyncadd [#allocation3], 0
      %s34 = sshll.u32 %s0, 4
      %s35 = int_to_ptr.hbm [resolvable:$true] %s34
      %s36 = sshll.u32 [#allocation2], 4
      %s37 = int_to_ptr.vmem [resolvable:$true] %s36
      %39 = dma.hbm_to_vmem [thread:$0]  %s35, 32, %s37, [#allocation3]
    $region5: #{tpu_custom_call.1} parent=1 // pred_fallthru
      _
    // Predicated region
    $region6: #{tpu_custom_call.1} parent=1 // pred_check
      _
    $region7: #{tpu_custom_call.1} parent=1 // pred_check_branch
      %41 = sbr.rel (0) target = $region9
    $region8: #{tpu_custom_call.1} parent=1 // pred_region
      %43 = vsyncadd [#allocation6], 0
      %s45 = sshll.u32 %s1, 4
      %s46 = int_to_ptr.hbm [resolvable:$true] %s45
      %s47 = sshll.u32 [#allocation5], 4
      %s48 = int_to_ptr.vmem [resolvable:$true] %s47
      %50 = dma.hbm_to_vmem [thread:$0]  %s46, 128, %s48, [#allocation6]
    $region9: #{tpu_custom_call.1} parent=1 // pred_fallthru
      _
    // Predicated region
    $region10: #{tpu_custom_call.1} parent=1 // pred_check
      _
    $region11: #{tpu_custom_call.1} parent=1 // pred_check_branch
      %52 = sbr.rel (0) target = $region13
    $region12: #{tpu_custom_call.1} parent=1 // pred_region
      %54 = vsyncadd [#allocation6], 0
      %s56 = sshll.u32 %s2, 4
      %s57 = int_to_ptr.hbm [resolvable:$true] %s56
      %s58 = sshll.u32 [#allocation7], 4
      %s59 = int_to_ptr.vmem [resolvable:$true] %s58
      %61 = dma.hbm_to_vmem [thread:$0]  %s57, 16, %s59, [#allocation6]
    $region13: #{tpu_custom_call.1} parent=1 // pred_fallthru
      _
    // Predicated region
    $region14: #{tpu_custom_call.1} parent=1 // pred_check
      _
    $region15: #{tpu_custom_call.1} parent=1 // pred_check_branch
      %63 = sbr.rel (0) target = $region17
    $region16: #{tpu_custom_call.1} parent=1 // pred_region
      %65 = vsyncadd [#allocation9], 0
      %s66 = sshll.u32 %s3, 4
      %s67 = int_to_ptr.hbm [resolvable:$true] %s66
      %s68 = sshll.u32 [#allocation8], 4
      %s69 = int_to_ptr.vmem [resolvable:$true] %s68
      %74 = dma.hbm_to_vmem [thread:$0]  %s67, 512, %s69, [#allocation9], 128, 128, 8
    $region17: #{tpu_custom_call.1} parent=1 // pred_fallthru
      _
    // Predicated region
    $region18: #{tpu_custom_call.1} parent=1 // pred_check
      _
    $region19: #{tpu_custom_call.1} parent=1 // pred_check_branch
      %76 = sbr.rel (0) target = $region21
    $region20: #{tpu_custom_call.1} parent=1 // pred_region
      %78 = vsyncadd [#allocation9], 0
      %s80 = sshll.u32 %s4, 4
      %s81 = int_to_ptr.hbm [resolvable:$true] %s80
      %s82 = sshll.u32 [#allocation10], 4
      %s83 = int_to_ptr.vmem [resolvable:$true] %s82
      %85 = dma.hbm_to_vmem [thread:$0]  %s81, 16, %s83, [#allocation9]
    $region21: #{tpu_custom_call.1} parent=1 // pred_fallthru
      _
    // Predicated region
    $region22: #{tpu_custom_call.1} parent=1 // pred_check
      _
    $region23: #{tpu_custom_call.1} parent=1 // pred_check_branch
      %87 = sbr.rel (0) target = $region25
    $region24: #{tpu_custom_call.1} parent=1 // pred_region
      _
    $region25: #{tpu_custom_call.1} parent=1 // pred_fallthru
      _
    // Predicated region
    $region26: #{tpu_custom_call.1} parent=1 // pred_check
      _
    $region27: #{tpu_custom_call.1} parent=1 // pred_check_branch
      %89 = sbr.rel (0) target = $region29
    $region28: #{tpu_custom_call.1} parent=1 // pred_region
      %91 = vsyncadd [#allocation12], 0
      %s93 = sshll.u32 %s6, 4
      %s94 = int_to_ptr.hbm [resolvable:$true] %s93
      %s95 = sshll.u32 [#allocation11], 4
      %s96 = int_to_ptr.vmem [resolvable:$true] %s95
      %98 = dma.hbm_to_vmem [thread:$0]  %s94, 16, %s96, [#allocation12]
    $region29: #{tpu_custom_call.1} parent=1 // pred_fallthru
      _
    // Predicated region
    $region30: #{tpu_custom_call.1} parent=1 // pred_check
      _
    $region31: #{tpu_custom_call.1} parent=1 // pred_check_branch
      %100 = sbr.rel (0) target = $region33
    $region32: #{tpu_custom_call.1} parent=1 // pred_region
      %102 = vsyncadd [#allocation12], 0
      %s103 = sshll.u32 %s7, 4
      %s104 = int_to_ptr.hbm [resolvable:$true] %s103
      %s105 = sshll.u32 [#allocation13], 4
      %s106 = int_to_ptr.vmem [resolvable:$true] %s105
      %111 = dma.hbm_to_vmem [thread:$0]  %s104, 256, %s106, [#allocation12], 128, 128, 8
    $region33: #{tpu_custom_call.1} parent=1 // pred_fallthru
      _
    // Predicated region
    $region34: #{tpu_custom_call.1} parent=1 // pred_check
      _
    $region35: #{tpu_custom_call.1} parent=1 // pred_check_branch
      %113 = sbr.rel (0) target = $region37
    $region36: #{tpu_custom_call.1} parent=1 // pred_region
      %115 = vsyncadd [#allocation15], 0
      %s117 = sshll.u32 %s8, 4
      %s118 = int_to_ptr.hbm [resolvable:$true] %s117
      %s119 = sshll.u32 [#allocation14], 4
      %s120 = int_to_ptr.vmem [resolvable:$true] %s119
      %122 = dma.hbm_to_vmem [thread:$0]  %s118, 16, %s120, [#allocation15]
    $region37: #{tpu_custom_call.1} parent=1 // pred_fallthru
      _
    // Predicated region
    $region38: #{tpu_custom_call.1} parent=1 // pred_check
      _
    $region39: #{tpu_custom_call.1} parent=1 // pred_check_branch
      %124 = sbr.rel (0) target = $region41
    $region40: #{tpu_custom_call.1} parent=1 // pred_region
      %126 = vsyncadd [#allocation15], 0
      %s127 = sshll.u32 %s9, 4
      %s128 = int_to_ptr.hbm [resolvable:$true] %s127
      %s129 = sshll.u32 [#allocation16], 4
      %s130 = int_to_ptr.vmem [resolvable:$true] %s129
      %135 = dma.hbm_to_vmem [thread:$0]  %s128, 1024, %s130, [#allocation15], 512, 512, 32
    $region41: #{tpu_custom_call.1} parent=1 // pred_fallthru
      _
    // Predicated region
    $region42: #{tpu_custom_call.1} parent=1 // pred_check
      _
    $region43: #{tpu_custom_call.1} parent=1 // pred_check_branch
      %137 = sbr.rel (0) target = $region45
    $region44: #{tpu_custom_call.1} parent=1 // pred_region
      %139 = vsyncadd [#allocation18], 0
      %s141 = sshll.u32 %s10, 4
      %s142 = int_to_ptr.hbm [resolvable:$true] %s141
      %s143 = sshll.u32 [#allocation17], 4
      %s144 = int_to_ptr.vmem [resolvable:$true] %s143
      %146 = dma.hbm_to_vmem [thread:$0]  %s142, 64, %s144, [#allocation18]
    $region45: #{tpu_custom_call.1} parent=1 // pred_fallthru
      _
    // Predicated region
    $region46: #{tpu_custom_call.1} parent=1 // pred_check
      _
    $region47: #{tpu_custom_call.1} parent=1 // pred_check_branch
      %148 = sbr.rel (0) target = $region49
    $region48: #{tpu_custom_call.1} parent=1 // pred_region
      %150 = vsyncadd [#allocation18], 0
      %s151 = sshll.u32 %s11, 4
      %s152 = int_to_ptr.hbm [resolvable:$true] %s151
      %s153 = sshll.u32 [#allocation19], 4
      %s154 = int_to_ptr.vmem [resolvable:$true] %s153
      %159 = dma.hbm_to_vmem [thread:$0]  %s152, 65536, %s154, [#allocation18], 1024, 1024, 64
    $region49: #{tpu_custom_call.1} parent=1 // pred_fallthru
      _
    // Predicated region
    $region50: #{tpu_custom_call.1} parent=1 // pred_check
      _
    $region51: #{tpu_custom_call.1} parent=1 // pred_check_branch
      %161 = sbr.rel (0) target = $region53
    $region52: #{tpu_custom_call.1} parent=1 // pred_region
      %163 = vsyncadd [#allocation21], 0
      %s165 = sshll.u32 %s12, 4
      %s166 = int_to_ptr.hbm [resolvable:$true] %s165
      %s167 = sshll.u32 [#allocation20], 4
      %s168 = int_to_ptr.vmem [resolvable:$true] %s167
      %170 = dma.hbm_to_vmem [thread:$0]  %s166, 128, %s168, [#allocation21]
    $region53: #{tpu_custom_call.1} parent=1 // pred_fallthru
      _
    // Predicated region
    $region54: #{tpu_custom_call.1} parent=1 // pred_check
      _
    $region55: #{tpu_custom_call.1} parent=1 // pred_check_branch
      %172 = sbr.rel (0) target = $region57
    $region56: #{tpu_custom_call.1} parent=1 // pred_region
      %174 = vsyncadd [#allocation21], 0
      %s175 = sshll.u32 %s13, 4
      %s176 = int_to_ptr.hbm [resolvable:$true] %s175
      %s177 = sshll.u32 [#allocation22], 4
      %s178 = int_to_ptr.vmem [resolvable:$true] %s177
      %183 = dma.hbm_to_vmem [thread:$0]  %s176, 32768, %s178, [#allocation21], 256, 256, 16
    $region57: #{tpu_custom_call.1} parent=1 // pred_fallthru
      _
    // Predicated region
    $region58: #{tpu_custom_call.1} parent=1 // pred_check
      _
    $region59: #{tpu_custom_call.1} parent=1 // pred_check_branch
      %185 = sbr.rel (0) target = $region61
    $region60: #{tpu_custom_call.1} parent=1 // pred_region
      %187 = vsyncadd [#allocation24], 0
      %s189 = sshll.u32 %s14, 4
      %s190 = int_to_ptr.hbm [resolvable:$true] %s189
      %s191 = sshll.u32 [#allocation23], 4
      %s192 = int_to_ptr.vmem [resolvable:$true] %s191
      %194 = dma.hbm_to_vmem [thread:$0]  %s190, 32, %s192, [#allocation24]
    $region61: #{tpu_custom_call.1} parent=1 // pred_fallthru
      _
    // Predicated region
    $region62: #{tpu_custom_call.1} parent=1 // pred_check
      _
    $region63: #{tpu_custom_call.1} parent=1 // pred_check_branch
      %196 = sbr.rel (0) target = $region65
    $region64: #{tpu_custom_call.1} parent=1 // pred_region
      %198 = dma.done [#allocation3], 32
    $region65: #{tpu_custom_call.1} parent=1 // pred_fallthru
      _
    // Predicated region
    $region66: #{tpu_custom_call.1} parent=1 // pred_check
      _
    $region67: #{tpu_custom_call.1} parent=1 // pred_check_branch
      %200 = sbr.rel (0) target = $region69
    $region68: #{tpu_custom_call.1} parent=1 // pred_region
      %202 = dma.done [#allocation6], 128
    $region69: #{tpu_custom_call.1} parent=1 // pred_fallthru
      _
    // Predicated region
    $region70: #{tpu_custom_call.1} parent=1 // pred_check
      _
    $region71: #{tpu_custom_call.1} parent=1 // pred_check_branch
      %204 = sbr.rel (0) target = $region73
    $region72: #{tpu_custom_call.1} parent=1 // pred_region
      %206 = dma.done [#allocation6], 16
    $region73: #{tpu_custom_call.1} parent=1 // pred_fallthru
      _
    // Predicated region
    $region74: #{tpu_custom_call.1} parent=1 // pred_check
      _
    $region75: #{tpu_custom_call.1} parent=1 // pred_check_branch
      %208 = sbr.rel (0) target = $region77
    $region76: #{tpu_custom_call.1} parent=1 // pred_region
      %210 = dma.done [#allocation9], 512
    $region77: #{tpu_custom_call.1} parent=1 // pred_fallthru
      _
    // Predicated region
    $region78: #{tpu_custom_call.1} parent=1 // pred_check
      _
    $region79: #{tpu_custom_call.1} parent=1 // pred_check_branch
      %212 = sbr.rel (0) target = $region81
    $region80: #{tpu_custom_call.1} parent=1 // pred_region
      %214 = dma.done [#allocation9], 16
    $region81: #{tpu_custom_call.1} parent=1 // pred_fallthru
      _
    // Predicated region
    $region82: #{tpu_custom_call.1} parent=1 // pred_check
      _
    $region83: #{tpu_custom_call.1} parent=1 // pred_check_branch
      %216 = sbr.rel (0) target = $region85
    $region84: #{tpu_custom_call.1} parent=1 // pred_region
      %218 = dma.done [#allocation12], 16
    $region85: #{tpu_custom_call.1} parent=1 // pred_fallthru
      _
    // Predicated region
    $region86: #{tpu_custom_call.1} parent=1 // pred_check
      _
    $region87: #{tpu_custom_call.1} parent=1 // pred_check_branch
      %220 = sbr.rel (0) target = $region89
    $region88: #{tpu_custom_call.1} parent=1 // pred_region
      %222 = dma.done [#allocation12], 256
    $region89: #{tpu_custom_call.1} parent=1 // pred_fallthru
      _
    // Predicated region
    $region90: #{tpu_custom_call.1} parent=1 // pred_check
      _
    $region91: #{tpu_custom_call.1} parent=1 // pred_check_branch
      %224 = sbr.rel (0) target = $region93
    $region92: #{tpu_custom_call.1} parent=1 // pred_region
      %226 = dma.done [#allocation15], 16
    $region93: #{tpu_custom_call.1} parent=1 // pred_fallthru
      _
    // Predicated region
    $region94: #{tpu_custom_call.1} parent=1 // pred_check
      _
    $region95: #{tpu_custom_call.1} parent=1 // pred_check_branch
      %228 = sbr.rel (0) target = $region97
    $region96: #{tpu_custom_call.1} parent=1 // pred_region
      %230 = dma.done [#allocation15], 1024
    $region97: #{tpu_custom_call.1} parent=1 // pred_fallthru
      _
    // Predicated region
    $region98: #{tpu_custom_call.1} parent=1 // pred_check
      _
    $region99: #{tpu_custom_call.1} parent=1 // pred_check_branch
      %232 = sbr.rel (0) target = $region101
    $region100: #{tpu_custom_call.1} parent=1 // pred_region
      %234 = dma.done [#allocation18], 64
    $region101: #{tpu_custom_call.1} parent=1 // pred_fallthru
      _
    // Predicated region
    $region102: #{tpu_custom_call.1} parent=1 // pred_check
      _
    $region103: #{tpu_custom_call.1} parent=1 // pred_check_branch
      %236 = sbr.rel (0) target = $region105
    $region104: #{tpu_custom_call.1} parent=1 // pred_region
      %238 = dma.done [#allocation18], 65536
    $region105: #{tpu_custom_call.1} parent=1 // pred_fallthru
      _
    // Predicated region
    $region106: #{tpu_custom_call.1} parent=1 // pred_check
      _
    $region107: #{tpu_custom_call.1} parent=1 // pred_check_branch
      %240 = sbr.rel (0) target = $region109
    $region108: #{tpu_custom_call.1} parent=1 // pred_region
      %242 = dma.done [#allocation21], 128
    $region109: #{tpu_custom_call.1} parent=1 // pred_fallthru
      _
    // Predicated region
    $region110: #{tpu_custom_call.1} parent=1 // pred_check
      _
    $region111: #{tpu_custom_call.1} parent=1 // pred_check_branch
      %244 = sbr.rel (0) target = $region113
    $region112: #{tpu_custom_call.1} parent=1 // pred_region
      %246 = dma.done [#allocation21], 32768
    $region113: #{tpu_custom_call.1} parent=1 // pred_fallthru
      _
    // Predicated region
    $region114: #{tpu_custom_call.1} parent=1 // pred_check
      _
    $region115: #{tpu_custom_call.1} parent=1 // pred_check_branch
      %248 = sbr.rel (0) target = $region117
    $region116: #{tpu_custom_call.1} parent=1 // pred_region
      %250 = dma.done [#allocation24], 32
    $region117: #{tpu_custom_call.1} parent=1 // pred_fallthru
      _
    %v251 = vld [vmem:[#allocation2] sm:$0x3]
    %v252 = vld [vmem:[#allocation5] sm:$0xff]
    %v253 = vld [vmem:[#allocation7] sm:$0x1]
    %v255 = vperm.slane %v253, 0
    %vm257 = vcmask 64512
    %v259 = vsel %vm257, %v251, 0
    %261 = vmatpush.msra.mxu0 0.0
    %262 = vmatpush.msra.mxu0 0.0
    %263 = vmatpush.msra.mxu0 0.0
    %264 = vmatpush.msra.mxu0 0.0
    %265 = vmatpush.msra.mxu0 0.0
    %266 = vmatpush.msra.mxu0 0.0
    %267 = vmatpush.msra.mxu0 0.0
    %268 = vmatpush.msra.mxu0 0.0
    %269 = vmatpush.msra.mxu0 0.0
    %270 = vmatpush.msra.mxu0 0.0
    %271 = vmatpush.msra.mxu0 0.0
    %272 = vmatpush.msra.mxu0 0.0
    %273 = vmatpush.msra.mxu0 0.0
    %274 = vmatpush.msra.mxu0 0.0
    %275 = vmatpush.msra.mxu0 0.0
    %276 = vmatpush.msra.mxu0 %v252
    %277 = vmatmul.f32.gmra.mxu0 %v259
    %v278 = vpop.f32.mrf.mxu0
    %v279 = vadd.f32 %v255, %v278
    %280 = vdwg.mxu0
    %vm281 = vcmp.ge.f32.partialorder %v279, 0.0
    %v282 = vmul.f32 %v279, 0.2
    %v283 = vsel %vm281, %v279, %v282
    %v284 = vld [vmem:[#allocation8] sm:$0xff]
    %v285 = vld [vmem:[#allocation8 + $0x8] sm:$0xff]
    %v286 = vld [vmem:[#allocation8 + $0x10] sm:$0xff]
    %v287 = vld [vmem:[#allocation8 + $0x18] sm:$0xff]
    %v288 = vld [vmem:[#allocation10] sm:$0x1]
    %v290 = vperm.slane %v288, 0
    %vm292 = vcmask 261120
    %v294 = vsel %vm292, %v283, 0
    %296 = vmatpush.msra.mxu0 0.0
    %297 = vmatpush.msra.mxu0 0.0
    %298 = vmatpush.msra.mxu0 0.0
    %299 = vmatpush.msra.mxu0 0.0
    %300 = vmatpush.msra.mxu0 0.0
    %301 = vmatpush.msra.mxu0 0.0
    %302 = vmatpush.msra.mxu0 0.0
    %303 = vmatpush.msra.mxu0 0.0
    %304 = vmatpush.msra.mxu0 0.0
    %305 = vmatpush.msra.mxu0 0.0
    %306 = vmatpush.msra.mxu0 0.0
    %307 = vmatpush.msra.mxu0 0.0
    %308 = vmatpush.msra.mxu0 %v287
    %309 = vmatpush.msra.mxu0 %v286
    %310 = vmatpush.msra.mxu0 %v285
    %311 = vmatpush.msra.mxu0 %v284
    %312 = vmatmul.f32.gmra.mxu0 %v294
    %v313 = vpop.f32.mrf.mxu0
    %v314 = vadd.f32 %v290, %v313
    %315 = vdwg.mxu0
    %vm316 = vcmp.ge.f32.partialorder %v314, 0.0
    %v317 = vmul.f32 %v314, 0.2
    %v318 = vsel %vm316, %v314, %v317
    %v319 = vld [vmem:[%s5] sm:$0xff]
    %v320 = vld [vmem:[%s5 + $0x8] sm:$0xff]
    %v321 = vld [vmem:[%s5 + $0x10] sm:$0xff]
    %v322 = vld [vmem:[%s5 + $0x18] sm:$0xff]
    %v323 = vld [vmem:[#allocation11] sm:$0x1]
    %v325 = vperm.slane %v323, 0
    %v328 = vsel %vm292, %v318, 0
    %330 = vmatpush.msra.mxu0 0.0
    %331 = vmatpush.msra.mxu0 0.0
    %332 = vmatpush.msra.mxu0 0.0
    %333 = vmatpush.msra.mxu0 0.0
    %334 = vmatpush.msra.mxu0 0.0
    %335 = vmatpush.msra.mxu0 0.0
    %336 = vmatpush.msra.mxu0 0.0
    %337 = vmatpush.msra.mxu0 0.0
    %338 = vmatpush.msra.mxu0 0.0
    %339 = vmatpush.msra.mxu0 0.0
    %340 = vmatpush.msra.mxu0 0.0
    %341 = vmatpush.msra.mxu0 0.0
    %342 = vmatpush.msra.mxu0 %v322
    %343 = vmatpush.msra.mxu0 %v321
    %344 = vmatpush.msra.mxu0 %v320
    %345 = vmatpush.msra.mxu0 %v319
    %346 = vmatmul.f32.gmra.mxu0 %v328
    %v347 = vpop.f32.mrf.mxu0
    %v348 = vadd.f32 %v325, %v347
    %349 = vdwg.mxu0
    %vm350 = vcmp.ge.f32.partialorder %v348, 0.0
    %v351 = vmul.f32 %v348, 0.2
    %v352 = vsel %vm350, %v348, %v351
    %v353 = vld [vmem:[#allocation13] sm:$0xff]
    %v354 = vld [vmem:[#allocation13 + $0x8] sm:$0xff]
    %v355 = vld [vmem:[#allocation14] sm:$0x1]
    %v357 = vperm.slane %v355, 0
    %vm359 = vcmask 130048
    %v361 = vsel %vm359, %v352, 0
    %363 = vmatpush.msra.mxu0 0.0
    %364 = vmatpush.msra.mxu0 0.0
    %365 = vmatpush.msra.mxu0 0.0
    %366 = vmatpush.msra.mxu0 0.0
    %367 = vmatpush.msra.mxu0 0.0
    %368 = vmatpush.msra.mxu0 0.0
    %369 = vmatpush.msra.mxu0 0.0
    %370 = vmatpush.msra.mxu0 0.0
    %371 = vmatpush.msra.mxu0 0.0
    %372 = vmatpush.msra.mxu0 0.0
    %373 = vmatpush.msra.mxu0 0.0
    %374 = vmatpush.msra.mxu0 0.0
    %375 = vmatpush.msra.mxu0 0.0
    %376 = vmatpush.msra.mxu0 0.0
    %377 = vmatpush.msra.mxu0 %v354
    %378 = vmatpush.msra.mxu0 %v353
    %379 = vmatmul.f32.gmra.mxu0 %v361
    %v380 = vpop.f32.mrf.mxu0
    %v381 = vadd.f32 %v357, %v380
    %382 = vdwg.mxu0
    %vm383 = vcmp.ge.f32.partialorder %v381, 0.0
    %v384 = vmul.f32 %v381, 0.2
    %v385 = vsel %vm383, %v381, %v384
    %v386 = vld [vmem:[#allocation16] sm:$0xff]
    %v387 = vld [vmem:[#allocation16 + $0x8] sm:$0xff]
    %v388 = vld [vmem:[#allocation16 + $0x10] sm:$0xff]
    %v389 = vld [vmem:[#allocation16 + $0x18] sm:$0xff]
    %v390 = vld [vmem:[#allocation16 + $0x20] sm:$0xff]
    %v391 = vld [vmem:[#allocation16 + $0x28] sm:$0xff]
    %v392 = vld [vmem:[#allocation16 + $0x30] sm:$0xff]
    %v393 = vld [vmem:[#allocation16 + $0x38] sm:$0xff]
    %v394 = vld [vmem:[#allocation17] sm:$0xf]
    %v396 = vperm.slane %v394, 0
    %v397 = vperm.slane %v394, 1
    %v398 = vperm.slane %v394, 2
    %v399 = vperm.slane %v394, 3
    %v405 = vsel %vm359, %v385, 0
    %407 = vmatpush.msra.mxu0 0.0
    %408 = vmatpush.msra.mxu0 0.0
    %409 = vmatpush.msra.mxu0 0.0
    %410 = vmatpush.msra.mxu0 0.0
    %411 = vmatpush.msra.mxu0 0.0
    %412 = vmatpush.msra.mxu0 0.0
    %413 = vmatpush.msra.mxu0 0.0
    %414 = vmatpush.msra.mxu0 0.0
    %415 = vmatpush.msra.mxu0 0.0
    %416 = vmatpush.msra.mxu0 0.0
    %417 = vmatpush.msra.mxu0 0.0
    %418 = vmatpush.msra.mxu0 0.0
    %419 = vmatpush.msra.mxu0 0.0
    %420 = vmatpush.msra.mxu0 0.0
    %421 = vmatpush.msra.mxu0 %v390
    %422 = vmatpush.msra.mxu0 %v386
    %423 = vmatmul.f32.gmra.mxu0 %v405
    %v424 = vpop.f32.mrf.mxu0
    %v425 = vadd.f32 %v396, %v424
    %426 = vdwg.mxu0
    %427 = vmatpush.msra.mxu0 0.0
    %428 = vmatpush.msra.mxu0 0.0
    %429 = vmatpush.msra.mxu0 0.0
    %430 = vmatpush.msra.mxu0 0.0
    %431 = vmatpush.msra.mxu0 0.0
    %432 = vmatpush.msra.mxu0 0.0
    %433 = vmatpush.msra.mxu0 0.0
    %434 = vmatpush.msra.mxu0 0.0
    %435 = vmatpush.msra.mxu0 0.0
    %436 = vmatpush.msra.mxu0 0.0
    %437 = vmatpush.msra.mxu0 0.0
    %438 = vmatpush.msra.mxu0 0.0
    %439 = vmatpush.msra.mxu0 0.0
    %440 = vmatpush.msra.mxu0 0.0
    %441 = vmatpush.msra.mxu0 %v391
    %442 = vmatpush.msra.mxu0 %v387
    %443 = vmatmul.f32.gmra.mxu0 %v405
    %v444 = vpop.f32.mrf.mxu0
    %v445 = vadd.f32 %v397, %v444
    %446 = vdwg.mxu0
    %447 = vmatpush.msra.mxu0 0.0
    %448 = vmatpush.msra.mxu0 0.0
    %449 = vmatpush.msra.mxu0 0.0
    %450 = vmatpush.msra.mxu0 0.0
    %451 = vmatpush.msra.mxu0 0.0
    %452 = vmatpush.msra.mxu0 0.0
    %453 = vmatpush.msra.mxu0 0.0
    %454 = vmatpush.msra.mxu0 0.0
    %455 = vmatpush.msra.mxu0 0.0
    %456 = vmatpush.msra.mxu0 0.0
    %457 = vmatpush.msra.mxu0 0.0
    %458 = vmatpush.msra.mxu0 0.0
    %459 = vmatpush.msra.mxu0 0.0
    %460 = vmatpush.msra.mxu0 0.0
    %461 = vmatpush.msra.mxu0 %v392
    %462 = vmatpush.msra.mxu0 %v388
    %463 = vmatmul.f32.gmra.mxu0 %v405
    %v464 = vpop.f32.mrf.mxu0
    %v465 = vadd.f32 %v398, %v464
    %466 = vdwg.mxu0
    %467 = vmatpush.msra.mxu0 0.0
    %468 = vmatpush.msra.mxu0 0.0
    %469 = vmatpush.msra.mxu0 0.0
    %470 = vmatpush.msra.mxu0 0.0
    %471 = vmatpush.msra.mxu0 0.0
    %472 = vmatpush.msra.mxu0 0.0
    %473 = vmatpush.msra.mxu0 0.0
    %474 = vmatpush.msra.mxu0 0.0
    %475 = vmatpush.msra.mxu0 0.0
    %476 = vmatpush.msra.mxu0 0.0
    %477 = vmatpush.msra.mxu0 0.0
    %478 = vmatpush.msra.mxu0 0.0
    %479 = vmatpush.msra.mxu0 0.0
    %480 = vmatpush.msra.mxu0 0.0
    %481 = vmatpush.msra.mxu0 %v393
    %482 = vmatpush.msra.mxu0 %v389
    %483 = vmatmul.f32.gmra.mxu0 %v405
    %v484 = vpop.f32.mrf.mxu0
    %v485 = vadd.f32 %v399, %v484
    %486 = vdwg.mxu0
    %vm487 = vcmp.ge.f32.partialorder %v425, 0.0
    %vm488 = vcmp.ge.f32.partialorder %v445, 0.0
    %vm489 = vcmp.ge.f32.partialorder %v465, 0.0
    %vm490 = vcmp.ge.f32.partialorder %v485, 0.0
    %v491 = vmul.f32 %v425, 0.2
    %v492 = vmul.f32 %v445, 0.2
    %v493 = vmul.f32 %v465, 0.2
    %v494 = vmul.f32 %v485, 0.2
    %v495 = vsel %vm487, %v425, %v491
    %v496 = vsel %vm488, %v445, %v492
    %v497 = vsel %vm489, %v465, %v493
    %v498 = vsel %vm490, %v485, %v494
    %v499 = vld [vmem:[#allocation19] sm:$0xff]
    %v500 = vld [vmem:[#allocation19 + $0x8] sm:$0xff]
    %v501 = vld [vmem:[#allocation19 + $0x10] sm:$0xff]
    %v502 = vld [vmem:[#allocation19 + $0x18] sm:$0xff]
    %v503 = vld [vmem:[#allocation19 + $0x20] sm:$0xff]
    %v504 = vld [vmem:[#allocation19 + $0x28] sm:$0xff]
    %v505 = vld [vmem:[#allocation19 + $0x30] sm:$0xff]
    %v506 = vld [vmem:[#allocation19 + $0x38] sm:$0xff]
    %v507 = vld [vmem:[#allocation19 + $0x40] sm:$0xff]
    %v508 = vld [vmem:[#allocation19 + $0x48] sm:$0xff]
    %v509 = vld [vmem:[#allocation19 + $0x50] sm:$0xff]
    %v510 = vld [vmem:[#allocation19 + $0x58] sm:$0xff]
    %v511 = vld [vmem:[#allocation19 + $0x60] sm:$0xff]
    %v512 = vld [vmem:[#allocation19 + $0x68] sm:$0xff]
    %v513 = vld [vmem:[#allocation19 + $0x70] sm:$0xff]
    %v514 = vld [vmem:[#allocation19 + $0x78] sm:$0xff]
    %v515 = vld [vmem:[#allocation19 + $0x80] sm:$0xff]
    %v516 = vld [vmem:[#allocation19 + $0x88] sm:$0xff]
    %v517 = vld [vmem:[#allocation19 + $0x90] sm:$0xff]
    %v518 = vld [vmem:[#allocation19 + $0x98] sm:$0xff]
    %v519 = vld [vmem:[#allocation19 + $0xa0] sm:$0xff]
    %v520 = vld [vmem:[#allocation19 + $0xa8] sm:$0xff]
    %v521 = vld [vmem:[#allocation19 + $0xb0] sm:$0xff]
    %v522 = vld [vmem:[#allocation19 + $0xb8] sm:$0xff]
    %v523 = vld [vmem:[#allocation19 + $0xc0] sm:$0xff]
    %v524 = vld [vmem:[#allocation19 + $0xc8] sm:$0xff]
    %v525 = vld [vmem:[#allocation19 + $0xd0] sm:$0xff]
    %v526 = vld [vmem:[#allocation19 + $0xd8] sm:$0xff]
    %v527 = vld [vmem:[#allocation19 + $0xe0] sm:$0xff]
    %v528 = vld [vmem:[#allocation19 + $0xe8] sm:$0xff]
    %v529 = vld [vmem:[#allocation19 + $0xf0] sm:$0xff]
    %v530 = vld [vmem:[#allocation19 + $0xf8] sm:$0xff]
    %v531 = vld [vmem:[#allocation19 + $0x100] sm:$0xff]
    %v532 = vld [vmem:[#allocation19 + $0x108] sm:$0xff]
    %v533 = vld [vmem:[#allocation19 + $0x110] sm:$0xff]
    %v534 = vld [vmem:[#allocation19 + $0x118] sm:$0xff]
    %v535 = vld [vmem:[#allocation19 + $0x120] sm:$0xff]
    %v536 = vld [vmem:[#allocation19 + $0x128] sm:$0xff]
    %v537 = vld [vmem:[#allocation19 + $0x130] sm:$0xff]
    %v538 = vld [vmem:[#allocation19 + $0x138] sm:$0xff]
    %v539 = vld [vmem:[#allocation19 + $0x140] sm:$0xff]
    %v540 = vld [vmem:[#allocation19 + $0x148] sm:$0xff]
    %v541 = vld [vmem:[#allocation19 + $0x150] sm:$0xff]
    %v542 = vld [vmem:[#allocation19 + $0x158] sm:$0xff]
    %v543 = vld [vmem:[#allocation19 + $0x160] sm:$0xff]
    %v544 = vld [vmem:[#allocation19 + $0x168] sm:$0xff]
    %v545 = vld [vmem:[#allocation19 + $0x170] sm:$0xff]
    %v546 = vld [vmem:[#allocation19 + $0x178] sm:$0xff]
    %v547 = vld [vmem:[#allocation19 + $0x180] sm:$0xff]
    %v548 = vld [vmem:[#allocation19 + $0x188] sm:$0xff]
    %v549 = vld [vmem:[#allocation19 + $0x190] sm:$0xff]
    %v550 = vld [vmem:[#allocation19 + $0x198] sm:$0xff]
    %v551 = vld [vmem:[#allocation19 + $0x1a0] sm:$0xff]
    %v552 = vld [vmem:[#allocation19 + $0x1a8] sm:$0xff]
    %v553 = vld [vmem:[#allocation19 + $0x1b0] sm:$0xff]
    %v554 = vld [vmem:[#allocation19 + $0x1b8] sm:$0xff]
    %v555 = vld [vmem:[#allocation19 + $0x1c0] sm:$0xff]
    %v556 = vld [vmem:[#allocation19 + $0x1c8] sm:$0xff]
    %v557 = vld [vmem:[#allocation19 + $0x1d0] sm:$0xff]
    %v558 = vld [vmem:[#allocation19 + $0x1d8] sm:$0xff]
    %v559 = vld [vmem:[#allocation19 + $0x1e0] sm:$0xff]
    %v560 = vld [vmem:[#allocation19 + $0x1e8] sm:$0xff]
    %v561 = vld [vmem:[#allocation19 + $0x1f0] sm:$0xff]
    %v562 = vld [vmem:[#allocation19 + $0x1f8] sm:$0xff]
    %v563 = vld [vmem:[#allocation19 + $0x200] sm:$0xff]
    %v564 = vld [vmem:[#allocation19 + $0x208] sm:$0xff]
    %v565 = vld [vmem:[#allocation19 + $0x210] sm:$0xff]
    %v566 = vld [vmem:[#allocation19 + $0x218] sm:$0xff]
    %v567 = vld [vmem:[#allocation19 + $0x220] sm:$0xff]
    %v568 = vld [vmem:[#allocation19 + $0x228] sm:$0xff]
    %v569 = vld [vmem:[#allocation19 + $0x230] sm:$0xff]
    %v570 = vld [vmem:[#allocation19 + $0x238] sm:$0xff]
    %v571 = vld [vmem:[#allocation19 + $0x240] sm:$0xff]
    %v572 = vld [vmem:[#allocation19 + $0x248] sm:$0xff]
    %v573 = vld [vmem:[#allocation19 + $0x250] sm:$0xff]
    %v574 = vld [vmem:[#allocation19 + $0x258] sm:$0xff]
    %v575 = vld [vmem:[#allocation19 + $0x260] sm:$0xff]
    %v576 = vld [vmem:[#allocation19 + $0x268] sm:$0xff]
    %v577 = vld [vmem:[#allocation19 + $0x270] sm:$0xff]
    %v578 = vld [vmem:[#allocation19 + $0x278] sm:$0xff]
    %v579 = vld [vmem:[#allocation19 + $0x280] sm:$0xff]
    %v580 = vld [vmem:[#allocation19 + $0x288] sm:$0xff]
    %v581 = vld [vmem:[#allocation19 + $0x290] sm:$0xff]
    %v582 = vld [vmem:[#allocation19 + $0x298] sm:$0xff]
    %v583 = vld [vmem:[#allocation19 + $0x2a0] sm:$0xff]
    %v584 = vld [vmem:[#allocation19 + $0x2a8] sm:$0xff]
    %v585 = vld [vmem:[#allocation19 + $0x2b0] sm:$0xff]
    %v586 = vld [vmem:[#allocation19 + $0x2b8] sm:$0xff]
    %v587 = vld [vmem:[#allocation19 + $0x2c0] sm:$0xff]
    %v588 = vld [vmem:[#allocation19 + $0x2c8] sm:$0xff]
    %v589 = vld [vmem:[#allocation19 + $0x2d0] sm:$0xff]
    %v590 = vld [vmem:[#allocation19 + $0x2d8] sm:$0xff]
    %v591 = vld [vmem:[#allocation19 + $0x2e0] sm:$0xff]
    %v592 = vld [vmem:[#allocation19 + $0x2e8] sm:$0xff]
    %v593 = vld [vmem:[#allocation19 + $0x2f0] sm:$0xff]
    %v594 = vld [vmem:[#allocation19 + $0x2f8] sm:$0xff]
    %v595 = vld [vmem:[#allocation19 + $0x300] sm:$0xff]
    %v596 = vld [vmem:[#allocation19 + $0x308] sm:$0xff]
    %v597 = vld [vmem:[#allocation19 + $0x310] sm:$0xff]
    %v598 = vld [vmem:[#allocation19 + $0x318] sm:$0xff]
    %v599 = vld [vmem:[#allocation19 + $0x320] sm:$0xff]
    %v600 = vld [vmem:[#allocation19 + $0x328] sm:$0xff]
    %v601 = vld [vmem:[#allocation19 + $0x330] sm:$0xff]
    %v602 = vld [vmem:[#allocation19 + $0x338] sm:$0xff]
    %v603 = vld [vmem:[#allocation19 + $0x340] sm:$0xff]
    %v604 = vld [vmem:[#allocation19 + $0x348] sm:$0xff]
    %v605 = vld [vmem:[#allocation19 + $0x350] sm:$0xff]
    %v606 = vld [vmem:[#allocation19 + $0x358] sm:$0xff]
    %v607 = vld [vmem:[#allocation19 + $0x360] sm:$0xff]
    %v608 = vld [vmem:[#allocation19 + $0x368] sm:$0xff]
    %v609 = vld [vmem:[#allocation19 + $0x370] sm:$0xff]
    %v610 = vld [vmem:[#allocation19 + $0x378] sm:$0xff]
    %v611 = vld [vmem:[#allocation19 + $0x380] sm:$0xff]
    %v612 = vld [vmem:[#allocation19 + $0x388] sm:$0xff]
    %v613 = vld [vmem:[#allocation19 + $0x390] sm:$0xff]
    %v614 = vld [vmem:[#allocation19 + $0x398] sm:$0xff]
    %v615 = vld [vmem:[#allocation19 + $0x3a0] sm:$0xff]
    %v616 = vld [vmem:[#allocation19 + $0x3a8] sm:$0xff]
    %v617 = vld [vmem:[#allocation19 + $0x3b0] sm:$0xff]
    %v618 = vld [vmem:[#allocation19 + $0x3b8] sm:$0xff]
    %v619 = vld [vmem:[#allocation19 + $0x3c0] sm:$0xff]
    %v620 = vld [vmem:[#allocation19 + $0x3c8] sm:$0xff]
    %v621 = vld [vmem:[#allocation19 + $0x3d0] sm:$0xff]
    %v622 = vld [vmem:[#allocation19 + $0x3d8] sm:$0xff]
    %v623 = vld [vmem:[#allocation19 + $0x3e0] sm:$0xff]
    %v624 = vld [vmem:[#allocation19 + $0x3e8] sm:$0xff]
    %v625 = vld [vmem:[#allocation19 + $0x3f0] sm:$0xff]
    %v626 = vld [vmem:[#allocation19 + $0x3f8] sm:$0xff]
    %v627 = vld [vmem:[#allocation19 + $0x400] sm:$0xff]
    %v628 = vld [vmem:[#allocation19 + $0x408] sm:$0xff]
    %v629 = vld [vmem:[#allocation19 + $0x410] sm:$0xff]
    %v630 = vld [vmem:[#allocation19 + $0x418] sm:$0xff]
    %v631 = vld [vmem:[#allocation19 + $0x420] sm:$0xff]
    %v632 = vld [vmem:[#allocation19 + $0x428] sm:$0xff]
    %v633 = vld [vmem:[#allocation19 + $0x430] sm:$0xff]
    %v634 = vld [vmem:[#allocation19 + $0x438] sm:$0xff]
    %v635 = vld [vmem:[#allocation19 + $0x440] sm:$0xff]
    %v636 = vld [vmem:[#allocation19 + $0x448] sm:$0xff]
    %v637 = vld [vmem:[#allocation19 + $0x450] sm:$0xff]
    %v638 = vld [vmem:[#allocation19 + $0x458] sm:$0xff]
    %v639 = vld [vmem:[#allocation19 + $0x460] sm:$0xff]
    %v640 = vld [vmem:[#allocation19 + $0x468] sm:$0xff]
    %v641 = vld [vmem:[#allocation19 + $0x470] sm:$0xff]
    %v642 = vld [vmem:[#allocation19 + $0x478] sm:$0xff]
    %v643 = vld [vmem:[#allocation19 + $0x480] sm:$0xff]
    %v644 = vld [vmem:[#allocation19 + $0x488] sm:$0xff]
    %v645 = vld [vmem:[#allocation19 + $0x490] sm:$0xff]
    %v646 = vld [vmem:[#allocation19 + $0x498] sm:$0xff]
    %v647 = vld [vmem:[#allocation19 + $0x4a0] sm:$0xff]
    %v648 = vld [vmem:[#allocation19 + $0x4a8] sm:$0xff]
    %v649 = vld [vmem:[#allocation19 + $0x4b0] sm:$0xff]
    %v650 = vld [vmem:[#allocation19 + $0x4b8] sm:$0xff]
    %v651 = vld [vmem:[#allocation19 + $0x4c0] sm:$0xff]
    %v652 = vld [vmem:[#allocation19 + $0x4c8] sm:$0xff]
    %v653 = vld [vmem:[#allocation19 + $0x4d0] sm:$0xff]
    %v654 = vld [vmem:[#allocation19 + $0x4d8] sm:$0xff]
    %v655 = vld [vmem:[#allocation19 + $0x4e0] sm:$0xff]
    %v656 = vld [vmem:[#allocation19 + $0x4e8] sm:$0xff]
    %v657 = vld [vmem:[#allocation19 + $0x4f0] sm:$0xff]
    %v658 = vld [vmem:[#allocation19 + $0x4f8] sm:$0xff]
    %v659 = vld [vmem:[#allocation19 + $0x500] sm:$0xff]
    %v660 = vld [vmem:[#allocation19 + $0x508] sm:$0xff]
    %v661 = vld [vmem:[#allocation19 + $0x510] sm:$0xff]
    %v662 = vld [vmem:[#allocation19 + $0x518] sm:$0xff]
    %v663 = vld [vmem:[#allocation19 + $0x520] sm:$0xff]
    %v664 = vld [vmem:[#allocation19 + $0x528] sm:$0xff]
    %v665 = vld [vmem:[#allocation19 + $0x530] sm:$0xff]
    %v666 = vld [vmem:[#allocation19 + $0x538] sm:$0xff]
    %v667 = vld [vmem:[#allocation19 + $0x540] sm:$0xff]
    %v668 = vld [vmem:[#allocation19 + $0x548] sm:$0xff]
    %v669 = vld [vmem:[#allocation19 + $0x550] sm:$0xff]
    %v670 = vld [vmem:[#allocation19 + $0x558] sm:$0xff]
    %v671 = vld [vmem:[#allocation19 + $0x560] sm:$0xff]
    %v672 = vld [vmem:[#allocation19 + $0x568] sm:$0xff]
    %v673 = vld [vmem:[#allocation19 + $0x570] sm:$0xff]
    %v674 = vld [vmem:[#allocation19 + $0x578] sm:$0xff]
    %v675 = vld [vmem:[#allocation19 + $0x580] sm:$0xff]
    %v676 = vld [vmem:[#allocation19 + $0x588] sm:$0xff]
    %v677 = vld [vmem:[#allocation19 + $0x590] sm:$0xff]
    %v678 = vld [vmem:[#allocation19 + $0x598] sm:$0xff]
    %v679 = vld [vmem:[#allocation19 + $0x5a0] sm:$0xff]
    %v680 = vld [vmem:[#allocation19 + $0x5a8] sm:$0xff]
    %v681 = vld [vmem:[#allocation19 + $0x5b0] sm:$0xff]
    %v682 = vld [vmem:[#allocation19 + $0x5b8] sm:$0xff]
    %v683 = vld [vmem:[#allocation19 + $0x5c0] sm:$0xff]
    %v684 = vld [vmem:[#allocation19 + $0x5c8] sm:$0xff]
    %v685 = vld [vmem:[#allocation19 + $0x5d0] sm:$0xff]
    %v686 = vld [vmem:[#allocation19 + $0x5d8] sm:$0xff]
    %v687 = vld [vmem:[#allocation19 + $0x5e0] sm:$0xff]
    %v688 = vld [vmem:[#allocation19 + $0x5e8] sm:$0xff]
    %v689 = vld [vmem:[#allocation19 + $0x5f0] sm:$0xff]
    %v690 = vld [vmem:[#allocation19 + $0x5f8] sm:$0xff]
    %v691 = vld [vmem:[#allocation19 + $0x600] sm:$0xff]
    %v692 = vld [vmem:[#allocation19 + $0x608] sm:$0xff]
    %v693 = vld [vmem:[#allocation19 + $0x610] sm:$0xff]
    %v694 = vld [vmem:[#allocation19 + $0x618] sm:$0xff]
    %v695 = vld [vmem:[#allocation19 + $0x620] sm:$0xff]
    %v696 = vld [vmem:[#allocation19 + $0x628] sm:$0xff]
    %v697 = vld [vmem:[#allocation19 + $0x630] sm:$0xff]
    %v698 = vld [vmem:[#allocation19 + $0x638] sm:$0xff]
    %v699 = vld [vmem:[#allocation19 + $0x640] sm:$0xff]
    %v700 = vld [vmem:[#allocation19 + $0x648] sm:$0xff]
    %v701 = vld [vmem:[#allocation19 + $0x650] sm:$0xff]
    %v702 = vld [vmem:[#allocation19 + $0x658] sm:$0xff]
    %v703 = vld [vmem:[#allocation19 + $0x660] sm:$0xff]
    %v704 = vld [vmem:[#allocation19 + $0x668] sm:$0xff]
    %v705 = vld [vmem:[#allocation19 + $0x670] sm:$0xff]
    %v706 = vld [vmem:[#allocation19 + $0x678] sm:$0xff]
    %v707 = vld [vmem:[#allocation19 + $0x680] sm:$0xff]
    %v708 = vld [vmem:[#allocation19 + $0x688] sm:$0xff]
    %v709 = vld [vmem:[#allocation19 + $0x690] sm:$0xff]
    %v710 = vld [vmem:[#allocation19 + $0x698] sm:$0xff]
    %v711 = vld [vmem:[#allocation19 + $0x6a0] sm:$0xff]
    %v712 = vld [vmem:[#allocation19 + $0x6a8] sm:$0xff]
    %v713 = vld [vmem:[#allocation19 + $0x6b0] sm:$0xff]
    %v714 = vld [vmem:[#allocation19 + $0x6b8] sm:$0xff]
    %v715 = vld [vmem:[#allocation19 + $0x6c0] sm:$0xff]
    %v716 = vld [vmem:[#allocation19 + $0x6c8] sm:$0xff]
    %v717 = vld [vmem:[#allocation19 + $0x6d0] sm:$0xff]
    %v718 = vld [vmem:[#allocation19 + $0x6d8] sm:$0xff]
    %v719 = vld [vmem:[#allocation19 + $0x6e0] sm:$0xff]
    %v720 = vld [vmem:[#allocation19 + $0x6e8] sm:$0xff]
    %v721 = vld [vmem:[#allocation19 + $0x6f0] sm:$0xff]
    %v722 = vld [vmem:[#allocation19 + $0x6f8] sm:$0xff]
    %v723 = vld [vmem:[#allocation19 + $0x700] sm:$0xff]
    %v724 = vld [vmem:[#allocation19 + $0x708] sm:$0xff]
    %v725 = vld [vmem:[#allocation19 + $0x710] sm:$0xff]
    %v726 = vld [vmem:[#allocation19 + $0x718] sm:$0xff]
    %v727 = vld [vmem:[#allocation19 + $0x720] sm:$0xff]
    %v728 = vld [vmem:[#allocation19 + $0x728] sm:$0xff]
    %v729 = vld [vmem:[#allocation19 + $0x730] sm:$0xff]
    %v730 = vld [vmem:[#allocation19 + $0x738] sm:$0xff]
    %v731 = vld [vmem:[#allocation19 + $0x740] sm:$0xff]
    %v732 = vld [vmem:[#allocation19 + $0x748] sm:$0xff]
    %v733 = vld [vmem:[#allocation19 + $0x750] sm:$0xff]
    %v734 = vld [vmem:[#allocation19 + $0x758] sm:$0xff]
    %v735 = vld [vmem:[#allocation19 + $0x760] sm:$0xff]
    %v736 = vld [vmem:[#allocation19 + $0x768] sm:$0xff]
    %v737 = vld [vmem:[#allocation19 + $0x770] sm:$0xff]
    %v738 = vld [vmem:[#allocation19 + $0x778] sm:$0xff]
    %v739 = vld [vmem:[#allocation19 + $0x780] sm:$0xff]
    %v740 = vld [vmem:[#allocation19 + $0x788] sm:$0xff]
    %v741 = vld [vmem:[#allocation19 + $0x790] sm:$0xff]
    %v742 = vld [vmem:[#allocation19 + $0x798] sm:$0xff]
    %v743 = vld [vmem:[#allocation19 + $0x7a0] sm:$0xff]
    %v744 = vld [vmem:[#allocation19 + $0x7a8] sm:$0xff]
    %v745 = vld [vmem:[#allocation19 + $0x7b0] sm:$0xff]
    %v746 = vld [vmem:[#allocation19 + $0x7b8] sm:$0xff]
    %v747 = vld [vmem:[#allocation19 + $0x7c0] sm:$0xff]
    %v748 = vld [vmem:[#allocation19 + $0x7c8] sm:$0xff]
    %v749 = vld [vmem:[#allocation19 + $0x7d0] sm:$0xff]
    %v750 = vld [vmem:[#allocation19 + $0x7d8] sm:$0xff]
    %v751 = vld [vmem:[#allocation19 + $0x7e0] sm:$0xff]
    %v752 = vld [vmem:[#allocation19 + $0x7e8] sm:$0xff]
    %v753 = vld [vmem:[#allocation19 + $0x7f0] sm:$0xff]
    %v754 = vld [vmem:[#allocation19 + $0x7f8] sm:$0xff]
    %v755 = vld [vmem:[#allocation19 + $0x800] sm:$0xff]
    %v756 = vld [vmem:[#allocation19 + $0x808] sm:$0xff]
    %v757 = vld [vmem:[#allocation19 + $0x810] sm:$0xff]
    %v758 = vld [vmem:[#allocation19 + $0x818] sm:$0xff]
    %v759 = vld [vmem:[#allocation19 + $0x820] sm:$0xff]
    %v760 = vld [vmem:[#allocation19 + $0x828] sm:$0xff]
    %v761 = vld [vmem:[#allocation19 + $0x830] sm:$0xff]
    %v762 = vld [vmem:[#allocation19 + $0x838] sm:$0xff]
    %v763 = vld [vmem:[#allocation19 + $0x840] sm:$0xff]
    %v764 = vld [vmem:[#allocation19 + $0x848] sm:$0xff]
    %v765 = vld [vmem:[#allocation19 + $0x850] sm:$0xff]
    %v766 = vld [vmem:[#allocation19 + $0x858] sm:$0xff]
    %v767 = vld [vmem:[#allocation19 + $0x860] sm:$0xff]
    %v768 = vld [vmem:[#allocation19 + $0x868] sm:$0xff]
    %v769 = vld [vmem:[#allocation19 + $0x870] sm:$0xff]
    %v770 = vld [vmem:[#allocation19 + $0x878] sm:$0xff]
    %v771 = vld [vmem:[#allocation19 + $0x880] sm:$0xff]
    %v772 = vld [vmem:[#allocation19 + $0x888] sm:$0xff]
    %v773 = vld [vmem:[#allocation19 + $0x890] sm:$0xff]
    %v774 = vld [vmem:[#allocation19 + $0x898] sm:$0xff]
    %v775 = vld [vmem:[#allocation19 + $0x8a0] sm:$0xff]
    %v776 = vld [vmem:[#allocation19 + $0x8a8] sm:$0xff]
    %v777 = vld [vmem:[#allocation19 + $0x8b0] sm:$0xff]
    %v778 = vld [vmem:[#allocation19 + $0x8b8] sm:$0xff]
    %v779 = vld [vmem:[#allocation19 + $0x8c0] sm:$0xff]
    %v780 = vld [vmem:[#allocation19 + $0x8c8] sm:$0xff]
    %v781 = vld [vmem:[#allocation19 + $0x8d0] sm:$0xff]
    %v782 = vld [vmem:[#allocation19 + $0x8d8] sm:$0xff]
    %v783 = vld [vmem:[#allocation19 + $0x8e0] sm:$0xff]
    %v784 = vld [vmem:[#allocation19 + $0x8e8] sm:$0xff]
    %v785 = vld [vmem:[#allocation19 + $0x8f0] sm:$0xff]
    %v786 = vld [vmem:[#allocation19 + $0x8f8] sm:$0xff]
    %v787 = vld [vmem:[#allocation19 + $0x900] sm:$0xff]
    %v788 = vld [vmem:[#allocation19 + $0x908] sm:$0xff]
    %v789 = vld [vmem:[#allocation19 + $0x910] sm:$0xff]
    %v790 = vld [vmem:[#allocation19 + $0x918] sm:$0xff]
    %v791 = vld [vmem:[#allocation19 + $0x920] sm:$0xff]
    %v792 = vld [vmem:[#allocation19 + $0x928] sm:$0xff]
    %v793 = vld [vmem:[#allocation19 + $0x930] sm:$0xff]
    %v794 = vld [vmem:[#allocation19 + $0x938] sm:$0xff]
    %v795 = vld [vmem:[#allocation19 + $0x940] sm:$0xff]
    %v796 = vld [vmem:[#allocation19 + $0x948] sm:$0xff]
    %v797 = vld [vmem:[#allocation19 + $0x950] sm:$0xff]
    %v798 = vld [vmem:[#allocation19 + $0x958] sm:$0xff]
    %v799 = vld [vmem:[#allocation19 + $0x960] sm:$0xff]
    %v800 = vld [vmem:[#allocation19 + $0x968] sm:$0xff]
    %v801 = vld [vmem:[#allocation19 + $0x970] sm:$0xff]
    %v802 = vld [vmem:[#allocation19 + $0x978] sm:$0xff]
    %v803 = vld [vmem:[#allocation19 + $0x980] sm:$0xff]
    %v804 = vld [vmem:[#allocation19 + $0x988] sm:$0xff]
    %v805 = vld [vmem:[#allocation19 + $0x990] sm:$0xff]
    %v806 = vld [vmem:[#allocation19 + $0x998] sm:$0xff]
    %v807 = vld [vmem:[#allocation19 + $0x9a0] sm:$0xff]
    %v808 = vld [vmem:[#allocation19 + $0x9a8] sm:$0xff]
    %v809 = vld [vmem:[#allocation19 + $0x9b0] sm:$0xff]
    %v810 = vld [vmem:[#allocation19 + $0x9b8] sm:$0xff]
    %v811 = vld [vmem:[#allocation19 + $0x9c0] sm:$0xff]
    %v812 = vld [vmem:[#allocation19 + $0x9c8] sm:$0xff]
    %v813 = vld [vmem:[#allocation19 + $0x9d0] sm:$0xff]
    %v814 = vld [vmem:[#allocation19 + $0x9d8] sm:$0xff]
    %v815 = vld [vmem:[#allocation19 + $0x9e0] sm:$0xff]
    %v816 = vld [vmem:[#allocation19 + $0x9e8] sm:$0xff]
    %v817 = vld [vmem:[#allocation19 + $0x9f0] sm:$0xff]
    %v818 = vld [vmem:[#allocation19 + $0x9f8] sm:$0xff]
    %v819 = vld [vmem:[#allocation19 + $0xa00] sm:$0xff]
    %v820 = vld [vmem:[#allocation19 + $0xa08] sm:$0xff]
    %v821 = vld [vmem:[#allocation19 + $0xa10] sm:$0xff]
    %v822 = vld [vmem:[#allocation19 + $0xa18] sm:$0xff]
    %v823 = vld [vmem:[#allocation19 + $0xa20] sm:$0xff]
    %v824 = vld [vmem:[#allocation19 + $0xa28] sm:$0xff]
    %v825 = vld [vmem:[#allocation19 + $0xa30] sm:$0xff]
    %v826 = vld [vmem:[#allocation19 + $0xa38] sm:$0xff]
    %v827 = vld [vmem:[#allocation19 + $0xa40] sm:$0xff]
    %v828 = vld [vmem:[#allocation19 + $0xa48] sm:$0xff]
    %v829 = vld [vmem:[#allocation19 + $0xa50] sm:$0xff]
    %v830 = vld [vmem:[#allocation19 + $0xa58] sm:$0xff]
    %v831 = vld [vmem:[#allocation19 + $0xa60] sm:$0xff]
    %v832 = vld [vmem:[#allocation19 + $0xa68] sm:$0xff]
    %v833 = vld [vmem:[#allocation19 + $0xa70] sm:$0xff]
    %v834 = vld [vmem:[#allocation19 + $0xa78] sm:$0xff]
    %v835 = vld [vmem:[#allocation19 + $0xa80] sm:$0xff]
    %v836 = vld [vmem:[#allocation19 + $0xa88] sm:$0xff]
    %v837 = vld [vmem:[#allocation19 + $0xa90] sm:$0xff]
    %v838 = vld [vmem:[#allocation19 + $0xa98] sm:$0xff]
    %v839 = vld [vmem:[#allocation19 + $0xaa0] sm:$0xff]
    %v840 = vld [vmem:[#allocation19 + $0xaa8] sm:$0xff]
    %v841 = vld [vmem:[#allocation19 + $0xab0] sm:$0xff]
    %v842 = vld [vmem:[#allocation19 + $0xab8] sm:$0xff]
    %v843 = vld [vmem:[#allocation19 + $0xac0] sm:$0xff]
    %v844 = vld [vmem:[#allocation19 + $0xac8] sm:$0xff]
    %v845 = vld [vmem:[#allocation19 + $0xad0] sm:$0xff]
    %v846 = vld [vmem:[#allocation19 + $0xad8] sm:$0xff]
    %v847 = vld [vmem:[#allocation19 + $0xae0] sm:$0xff]
    %v848 = vld [vmem:[#allocation19 + $0xae8] sm:$0xff]
    %v849 = vld [vmem:[#allocation19 + $0xaf0] sm:$0xff]
    %v850 = vld [vmem:[#allocation19 + $0xaf8] sm:$0xff]
    %v851 = vld [vmem:[#allocation19 + $0xb00] sm:$0xff]
    %v852 = vld [vmem:[#allocation19 + $0xb08] sm:$0xff]
    %v853 = vld [vmem:[#allocation19 + $0xb10] sm:$0xff]
    %v854 = vld [vmem:[#allocation19 + $0xb18] sm:$0xff]
    %v855 = vld [vmem:[#allocation19 + $0xb20] sm:$0xff]
    %v856 = vld [vmem:[#allocation19 + $0xb28] sm:$0xff]
    %v857 = vld [vmem:[#allocation19 + $0xb30] sm:$0xff]
    %v858 = vld [vmem:[#allocation19 + $0xb38] sm:$0xff]
    %v859 = vld [vmem:[#allocation19 + $0xb40] sm:$0xff]
    %v860 = vld [vmem:[#allocation19 + $0xb48] sm:$0xff]
    %v861 = vld [vmem:[#allocation19 + $0xb50] sm:$0xff]
    %v862 = vld [vmem:[#allocation19 + $0xb58] sm:$0xff]
    %v863 = vld [vmem:[#allocation19 + $0xb60] sm:$0xff]
    %v864 = vld [vmem:[#allocation19 + $0xb68] sm:$0xff]
    %v865 = vld [vmem:[#allocation19 + $0xb70] sm:$0xff]
    %v866 = vld [vmem:[#allocation19 + $0xb78] sm:$0xff]
    %v867 = vld [vmem:[#allocation19 + $0xb80] sm:$0xff]
    %v868 = vld [vmem:[#allocation19 + $0xb88] sm:$0xff]
    %v869 = vld [vmem:[#allocation19 + $0xb90] sm:$0xff]
    %v870 = vld [vmem:[#allocation19 + $0xb98] sm:$0xff]
    %v871 = vld [vmem:[#allocation19 + $0xba0] sm:$0xff]
    %v872 = vld [vmem:[#allocation19 + $0xba8] sm:$0xff]
    %v873 = vld [vmem:[#allocation19 + $0xbb0] sm:$0xff]
    %v874 = vld [vmem:[#allocation19 + $0xbb8] sm:$0xff]
    %v875 = vld [vmem:[#allocation19 + $0xbc0] sm:$0xff]
    %v876 = vld [vmem:[#allocation19 + $0xbc8] sm:$0xff]
    %v877 = vld [vmem:[#allocation19 + $0xbd0] sm:$0xff]
    %v878 = vld [vmem:[#allocation19 + $0xbd8] sm:$0xff]
    %v879 = vld [vmem:[#allocation19 + $0xbe0] sm:$0xff]
    %v880 = vld [vmem:[#allocation19 + $0xbe8] sm:$0xff]
    %v881 = vld [vmem:[#allocation19 + $0xbf0] sm:$0xff]
    %v882 = vld [vmem:[#allocation19 + $0xbf8] sm:$0xff]
    %v883 = vld [vmem:[#allocation19 + $0xc00] sm:$0xff]
    %v884 = vld [vmem:[#allocation19 + $0xc08] sm:$0xff]
    %v885 = vld [vmem:[#allocation19 + $0xc10] sm:$0xff]
    %v886 = vld [vmem:[#allocation19 + $0xc18] sm:$0xff]
    %v887 = vld [vmem:[#allocation19 + $0xc20] sm:$0xff]
    %v888 = vld [vmem:[#allocation19 + $0xc28] sm:$0xff]
    %v889 = vld [vmem:[#allocation19 + $0xc30] sm:$0xff]
    %v890 = vld [vmem:[#allocation19 + $0xc38] sm:$0xff]
    %v891 = vld [vmem:[#allocation19 + $0xc40] sm:$0xff]
    %v892 = vld [vmem:[#allocation19 + $0xc48] sm:$0xff]
    %v893 = vld [vmem:[#allocation19 + $0xc50] sm:$0xff]
    %v894 = vld [vmem:[#allocation19 + $0xc58] sm:$0xff]
    %v895 = vld [vmem:[#allocation19 + $0xc60] sm:$0xff]
    %v896 = vld [vmem:[#allocation19 + $0xc68] sm:$0xff]
    %v897 = vld [vmem:[#allocation19 + $0xc70] sm:$0xff]
    %v898 = vld [vmem:[#allocation19 + $0xc78] sm:$0xff]
    %v899 = vld [vmem:[#allocation19 + $0xc80] sm:$0xff]
    %v900 = vld [vmem:[#allocation19 + $0xc88] sm:$0xff]
    %v901 = vld [vmem:[#allocation19 + $0xc90] sm:$0xff]
    %v902 = vld [vmem:[#allocation19 + $0xc98] sm:$0xff]
    %v903 = vld [vmem:[#allocation19 + $0xca0] sm:$0xff]
    %v904 = vld [vmem:[#allocation19 + $0xca8] sm:$0xff]
    %v905 = vld [vmem:[#allocation19 + $0xcb0] sm:$0xff]
    %v906 = vld [vmem:[#allocation19 + $0xcb8] sm:$0xff]
    %v907 = vld [vmem:[#allocation19 + $0xcc0] sm:$0xff]
    %v908 = vld [vmem:[#allocation19 + $0xcc8] sm:$0xff]
    %v909 = vld [vmem:[#allocation19 + $0xcd0] sm:$0xff]
    %v910 = vld [vmem:[#allocation19 + $0xcd8] sm:$0xff]
    %v911 = vld [vmem:[#allocation19 + $0xce0] sm:$0xff]
    %v912 = vld [vmem:[#allocation19 + $0xce8] sm:$0xff]
    %v913 = vld [vmem:[#allocation19 + $0xcf0] sm:$0xff]
    %v914 = vld [vmem:[#allocation19 + $0xcf8] sm:$0xff]
    %v915 = vld [vmem:[#allocation19 + $0xd00] sm:$0xff]
    %v916 = vld [vmem:[#allocation19 + $0xd08] sm:$0xff]
    %v917 = vld [vmem:[#allocation19 + $0xd10] sm:$0xff]
    %v918 = vld [vmem:[#allocation19 + $0xd18] sm:$0xff]
    %v919 = vld [vmem:[#allocation19 + $0xd20] sm:$0xff]
    %v920 = vld [vmem:[#allocation19 + $0xd28] sm:$0xff]
    %v921 = vld [vmem:[#allocation19 + $0xd30] sm:$0xff]
    %v922 = vld [vmem:[#allocation19 + $0xd38] sm:$0xff]
    %v923 = vld [vmem:[#allocation19 + $0xd40] sm:$0xff]
    %v924 = vld [vmem:[#allocation19 + $0xd48] sm:$0xff]
    %v925 = vld [vmem:[#allocation19 + $0xd50] sm:$0xff]
    %v926 = vld [vmem:[#allocation19 + $0xd58] sm:$0xff]
    %v927 = vld [vmem:[#allocation19 + $0xd60] sm:$0xff]
    %v928 = vld [vmem:[#allocation19 + $0xd68] sm:$0xff]
    %v929 = vld [vmem:[#allocation19 + $0xd70] sm:$0xff]
    %v930 = vld [vmem:[#allocation19 + $0xd78] sm:$0xff]
    %v931 = vld [vmem:[#allocation19 + $0xd80] sm:$0xff]
    %v932 = vld [vmem:[#allocation19 + $0xd88] sm:$0xff]
    %v933 = vld [vmem:[#allocation19 + $0xd90] sm:$0xff]
    %v934 = vld [vmem:[#allocation19 + $0xd98] sm:$0xff]
    %v935 = vld [vmem:[#allocation19 + $0xda0] sm:$0xff]
    %v936 = vld [vmem:[#allocation19 + $0xda8] sm:$0xff]
    %v937 = vld [vmem:[#allocation19 + $0xdb0] sm:$0xff]
    %v938 = vld [vmem:[#allocation19 + $0xdb8] sm:$0xff]
    %v939 = vld [vmem:[#allocation19 + $0xdc0] sm:$0xff]
    %v940 = vld [vmem:[#allocation19 + $0xdc8] sm:$0xff]
    %v941 = vld [vmem:[#allocation19 + $0xdd0] sm:$0xff]
    %v942 = vld [vmem:[#allocation19 + $0xdd8] sm:$0xff]
    %v943 = vld [vmem:[#allocation19 + $0xde0] sm:$0xff]
    %v944 = vld [vmem:[#allocation19 + $0xde8] sm:$0xff]
    %v945 = vld [vmem:[#allocation19 + $0xdf0] sm:$0xff]
    %v946 = vld [vmem:[#allocation19 + $0xdf8] sm:$0xff]
    %v947 = vld [vmem:[#allocation19 + $0xe00] sm:$0xff]
    %v948 = vld [vmem:[#allocation19 + $0xe08] sm:$0xff]
    %v949 = vld [vmem:[#allocation19 + $0xe10] sm:$0xff]
    %v950 = vld [vmem:[#allocation19 + $0xe18] sm:$0xff]
    %v951 = vld [vmem:[#allocation19 + $0xe20] sm:$0xff]
    %v952 = vld [vmem:[#allocation19 + $0xe28] sm:$0xff]
    %v953 = vld [vmem:[#allocation19 + $0xe30] sm:$0xff]
    %v954 = vld [vmem:[#allocation19 + $0xe38] sm:$0xff]
    %v955 = vld [vmem:[#allocation19 + $0xe40] sm:$0xff]
    %v956 = vld [vmem:[#allocation19 + $0xe48] sm:$0xff]
    %v957 = vld [vmem:[#allocation19 + $0xe50] sm:$0xff]
    %v958 = vld [vmem:[#allocation19 + $0xe58] sm:$0xff]
    %v959 = vld [vmem:[#allocation19 + $0xe60] sm:$0xff]
    %v960 = vld [vmem:[#allocation19 + $0xe68] sm:$0xff]
    %v961 = vld [vmem:[#allocation19 + $0xe70] sm:$0xff]
    %v962 = vld [vmem:[#allocation19 + $0xe78] sm:$0xff]
    %v963 = vld [vmem:[#allocation19 + $0xe80] sm:$0xff]
    %v964 = vld [vmem:[#allocation19 + $0xe88] sm:$0xff]
    %v965 = vld [vmem:[#allocation19 + $0xe90] sm:$0xff]
    %v966 = vld [vmem:[#allocation19 + $0xe98] sm:$0xff]
    %v967 = vld [vmem:[#allocation19 + $0xea0] sm:$0xff]
    %v968 = vld [vmem:[#allocation19 + $0xea8] sm:$0xff]
    %v969 = vld [vmem:[#allocation19 + $0xeb0] sm:$0xff]
    %v970 = vld [vmem:[#allocation19 + $0xeb8] sm:$0xff]
    %v971 = vld [vmem:[#allocation19 + $0xec0] sm:$0xff]
    %v972 = vld [vmem:[#allocation19 + $0xec8] sm:$0xff]
    %v973 = vld [vmem:[#allocation19 + $0xed0] sm:$0xff]
    %v974 = vld [vmem:[#allocation19 + $0xed8] sm:$0xff]
    %v975 = vld [vmem:[#allocation19 + $0xee0] sm:$0xff]
    %v976 = vld [vmem:[#allocation19 + $0xee8] sm:$0xff]
    %v977 = vld [vmem:[#allocation19 + $0xef0] sm:$0xff]
    %v978 = vld [vmem:[#allocation19 + $0xef8] sm:$0xff]
    %v979 = vld [vmem:[#allocation19 + $0xf00] sm:$0xff]
    %v980 = vld [vmem:[#allocation19 + $0xf08] sm:$0xff]
    %v981 = vld [vmem:[#allocation19 + $0xf10] sm:$0xff]
    %v982 = vld [vmem:[#allocation19 + $0xf18] sm:$0xff]
    %v983 = vld [vmem:[#allocation19 + $0xf20] sm:$0xff]
    %v984 = vld [vmem:[#allocation19 + $0xf28] sm:$0xff]
    %v985 = vld [vmem:[#allocation19 + $0xf30] sm:$0xff]
    %v986 = vld [vmem:[#allocation19 + $0xf38] sm:$0xff]
    %v987 = vld [vmem:[#allocation19 + $0xf40] sm:$0xff]
    %v988 = vld [vmem:[#allocation19 + $0xf48] sm:$0xff]
    %v989 = vld [vmem:[#allocation19 + $0xf50] sm:$0xff]
    %v990 = vld [vmem:[#allocation19 + $0xf58] sm:$0xff]
    %v991 = vld [vmem:[#allocation19 + $0xf60] sm:$0xff]
    %v992 = vld [vmem:[#allocation19 + $0xf68] sm:$0xff]
    %v993 = vld [vmem:[#allocation19 + $0xf70] sm:$0xff]
    %v994 = vld [vmem:[#allocation19 + $0xf78] sm:$0xff]
    %v995 = vld [vmem:[#allocation19 + $0xf80] sm:$0xff]
    %v996 = vld [vmem:[#allocation19 + $0xf88] sm:$0xff]
    %v997 = vld [vmem:[#allocation19 + $0xf90] sm:$0xff]
    %v998 = vld [vmem:[#allocation19 + $0xf98] sm:$0xff]
    %v999 = vld [vmem:[#allocation19 + $0xfa0] sm:$0xff]
    %v1000 = vld [vmem:[#allocation19 + $0xfa8] sm:$0xff]
    %v1001 = vld [vmem:[#allocation19 + $0xfb0] sm:$0xff]
    %v1002 = vld [vmem:[#allocation19 + $0xfb8] sm:$0xff]
    %v1003 = vld [vmem:[#allocation19 + $0xfc0] sm:$0xff]
    %v1004 = vld [vmem:[#allocation19 + $0xfc8] sm:$0xff]
    %v1005 = vld [vmem:[#allocation19 + $0xfd0] sm:$0xff]
    %v1006 = vld [vmem:[#allocation19 + $0xfd8] sm:$0xff]
    %v1007 = vld [vmem:[#allocation19 + $0xfe0] sm:$0xff]
    %v1008 = vld [vmem:[#allocation19 + $0xfe8] sm:$0xff]
    %v1009 = vld [vmem:[#allocation19 + $0xff0] sm:$0xff]
    %v1010 = vld [vmem:[#allocation19 + $0xff8] sm:$0xff]
    %v1011 = vld [vmem:[#allocation20] sm:$0xff]
    %v1013 = vperm.slane %v1011, 0
    %v1014 = vperm.slane %v1011, 1
    %v1015 = vperm.slane %v1011, 2
    %v1016 = vperm.slane %v1011, 3
    %v1017 = vperm.slane %v1011, 4
    %v1018 = vperm.slane %v1011, 5
    %v1019 = vperm.slane %v1011, 6
    %v1020 = vperm.slane %v1011, 7
    %1029 = vmatpush.msra.mxu0 %v619
    %1030 = vmatpush.msra.mxu0 %v611
    %1031 = vmatpush.msra.mxu0 %v603
    %1032 = vmatpush.msra.mxu0 %v595
    %1033 = vmatpush.msra.mxu0 %v587
    %1034 = vmatpush.msra.mxu0 %v579
    %1035 = vmatpush.msra.mxu0 %v571
    %1036 = vmatpush.msra.mxu0 %v563
    %1037 = vmatpush.msra.mxu0 %v555
    %1038 = vmatpush.msra.mxu0 %v547
    %1039 = vmatpush.msra.mxu0 %v539
    %1040 = vmatpush.msra.mxu0 %v531
    %1041 = vmatpush.msra.mxu0 %v523
    %1042 = vmatpush.msra.mxu0 %v515
    %1043 = vmatpush.msra.mxu0 %v507
    %1044 = vmatpush.msra.mxu0 %v499
    %1045 = vmatmul.f32.gmra.mxu0 %v495
    %v1046 = vpop.f32.mrf.mxu0
    %v1047 = vadd.f32 %v1013, %v1046
    %1048 = vdwg.mxu0
    %1049 = vmatpush.msra.mxu0 %v747
    %1050 = vmatpush.msra.mxu0 %v739
    %1051 = vmatpush.msra.mxu0 %v731
    %1052 = vmatpush.msra.mxu0 %v723
    %1053 = vmatpush.msra.mxu0 %v715
    %1054 = vmatpush.msra.mxu0 %v707
    %1055 = vmatpush.msra.mxu0 %v699
    %1056 = vmatpush.msra.mxu0 %v691
    %1057 = vmatpush.msra.mxu0 %v683
    %1058 = vmatpush.msra.mxu0 %v675
    %1059 = vmatpush.msra.mxu0 %v667
    %1060 = vmatpush.msra.mxu0 %v659
    %1061 = vmatpush.msra.mxu0 %v651
    %1062 = vmatpush.msra.mxu0 %v643
    %1063 = vmatpush.msra.mxu0 %v635
    %1064 = vmatpush.msra.mxu0 %v627
    %1065 = vmatmul.f32.gmra.mxu0 %v496
    %v1066 = vpop.f32.mrf.mxu0
    %v1067 = vadd.f32 %v1047, %v1066
    %1068 = vdwg.mxu0
    %1069 = vmatpush.msra.mxu0 %v875
    %1070 = vmatpush.msra.mxu0 %v867
    %1071 = vmatpush.msra.mxu0 %v859
    %1072 = vmatpush.msra.mxu0 %v851
    %1073 = vmatpush.msra.mxu0 %v843
    %1074 = vmatpush.msra.mxu0 %v835
    %1075 = vmatpush.msra.mxu0 %v827
    %1076 = vmatpush.msra.mxu0 %v819
    %1077 = vmatpush.msra.mxu0 %v811
    %1078 = vmatpush.msra.mxu0 %v803
    %1079 = vmatpush.msra.mxu0 %v795
    %1080 = vmatpush.msra.mxu0 %v787
    %1081 = vmatpush.msra.mxu0 %v779
    %1082 = vmatpush.msra.mxu0 %v771
    %1083 = vmatpush.msra.mxu0 %v763
    %1084 = vmatpush.msra.mxu0 %v755
    %1085 = vmatmul.f32.gmra.mxu0 %v497
    %v1086 = vpop.f32.mrf.mxu0
    %v1087 = vadd.f32 %v1067, %v1086
    %1088 = vdwg.mxu0
    %1089 = vmatpush.msra.mxu0 %v1003
    %1090 = vmatpush.msra.mxu0 %v995
    %1091 = vmatpush.msra.mxu0 %v987
    %1092 = vmatpush.msra.mxu0 %v979
    %1093 = vmatpush.msra.mxu0 %v971
    %1094 = vmatpush.msra.mxu0 %v963
    %1095 = vmatpush.msra.mxu0 %v955
    %1096 = vmatpush.msra.mxu0 %v947
    %1097 = vmatpush.msra.mxu0 %v939
    %1098 = vmatpush.msra.mxu0 %v931
    %1099 = vmatpush.msra.mxu0 %v923
    %1100 = vmatpush.msra.mxu0 %v915
    %1101 = vmatpush.msra.mxu0 %v907
    %1102 = vmatpush.msra.mxu0 %v899
    %1103 = vmatpush.msra.mxu0 %v891
    %1104 = vmatpush.msra.mxu0 %v883
    %1105 = vmatmul.f32.gmra.mxu0 %v498
    %v1106 = vpop.f32.mrf.mxu0
    %v1107 = vadd.f32 %v1087, %v1106
    %1108 = vdwg.mxu0
    %1109 = vmatpush.msra.mxu0 %v620
    %1110 = vmatpush.msra.mxu0 %v612
    %1111 = vmatpush.msra.mxu0 %v604
    %1112 = vmatpush.msra.mxu0 %v596
    %1113 = vmatpush.msra.mxu0 %v588
    %1114 = vmatpush.msra.mxu0 %v580
    %1115 = vmatpush.msra.mxu0 %v572
    %1116 = vmatpush.msra.mxu0 %v564
    %1117 = vmatpush.msra.mxu0 %v556
    %1118 = vmatpush.msra.mxu0 %v548
    %1119 = vmatpush.msra.mxu0 %v540
    %1120 = vmatpush.msra.mxu0 %v532
    %1121 = vmatpush.msra.mxu0 %v524
    %1122 = vmatpush.msra.mxu0 %v516
    %1123 = vmatpush.msra.mxu0 %v508
    %1124 = vmatpush.msra.mxu0 %v500
    %1125 = vmatmul.f32.gmra.mxu0 %v495
    %v1126 = vpop.f32.mrf.mxu0
    %v1127 = vadd.f32 %v1014, %v1126
    %1128 = vdwg.mxu0
    %1129 = vmatpush.msra.mxu0 %v748
    %1130 = vmatpush.msra.mxu0 %v740
    %1131 = vmatpush.msra.mxu0 %v732
    %1132 = vmatpush.msra.mxu0 %v724
    %1133 = vmatpush.msra.mxu0 %v716
    %1134 = vmatpush.msra.mxu0 %v708
    %1135 = vmatpush.msra.mxu0 %v700
    %1136 = vmatpush.msra.mxu0 %v692
    %1137 = vmatpush.msra.mxu0 %v684
    %1138 = vmatpush.msra.mxu0 %v676
    %1139 = vmatpush.msra.mxu0 %v668
    %1140 = vmatpush.msra.mxu0 %v660
    %1141 = vmatpush.msra.mxu0 %v652
    %1142 = vmatpush.msra.mxu0 %v644
    %1143 = vmatpush.msra.mxu0 %v636
    %1144 = vmatpush.msra.mxu0 %v628
    %1145 = vmatmul.f32.gmra.mxu0 %v496
    %v1146 = vpop.f32.mrf.mxu0
    %v1147 = vadd.f32 %v1127, %v1146
    %1148 = vdwg.mxu0
    %1149 = vmatpush.msra.mxu0 %v876
    %1150 = vmatpush.msra.mxu0 %v868
    %1151 = vmatpush.msra.mxu0 %v860
    %1152 = vmatpush.msra.mxu0 %v852
    %1153 = vmatpush.msra.mxu0 %v844
    %1154 = vmatpush.msra.mxu0 %v836
    %1155 = vmatpush.msra.mxu0 %v828
    %1156 = vmatpush.msra.mxu0 %v820
    %1157 = vmatpush.msra.mxu0 %v812
    %1158 = vmatpush.msra.mxu0 %v804
    %1159 = vmatpush.msra.mxu0 %v796
    %1160 = vmatpush.msra.mxu0 %v788
    %1161 = vmatpush.msra.mxu0 %v780
    %1162 = vmatpush.msra.mxu0 %v772
    %1163 = vmatpush.msra.mxu0 %v764
    %1164 = vmatpush.msra.mxu0 %v756
    %1165 = vmatmul.f32.gmra.mxu0 %v497
    %v1166 = vpop.f32.mrf.mxu0
    %v1167 = vadd.f32 %v1147, %v1166
    %1168 = vdwg.mxu0
    %1169 = vmatpush.msra.mxu0 %v1004
    %1170 = vmatpush.msra.mxu0 %v996
    %1171 = vmatpush.msra.mxu0 %v988
    %1172 = vmatpush.msra.mxu0 %v980
    %1173 = vmatpush.msra.mxu0 %v972
    %1174 = vmatpush.msra.mxu0 %v964
    %1175 = vmatpush.msra.mxu0 %v956
    %1176 = vmatpush.msra.mxu0 %v948
    %1177 = vmatpush.msra.mxu0 %v940
    %1178 = vmatpush.msra.mxu0 %v932
    %1179 = vmatpush.msra.mxu0 %v924
    %1180 = vmatpush.msra.mxu0 %v916
    %1181 = vmatpush.msra.mxu0 %v908
    %1182 = vmatpush.msra.mxu0 %v900
    %1183 = vmatpush.msra.mxu0 %v892
    %1184 = vmatpush.msra.mxu0 %v884
    %1185 = vmatmul.f32.gmra.mxu0 %v498
    %v1186 = vpop.f32.mrf.mxu0
    %v1187 = vadd.f32 %v1167, %v1186
    %1188 = vdwg.mxu0
    %1189 = vmatpush.msra.mxu0 %v621
    %1190 = vmatpush.msra.mxu0 %v613
    %1191 = vmatpush.msra.mxu0 %v605
    %1192 = vmatpush.msra.mxu0 %v597
    %1193 = vmatpush.msra.mxu0 %v589
    %1194 = vmatpush.msra.mxu0 %v581
    %1195 = vmatpush.msra.mxu0 %v573
    %1196 = vmatpush.msra.mxu0 %v565
    %1197 = vmatpush.msra.mxu0 %v557
    %1198 = vmatpush.msra.mxu0 %v549
    %1199 = vmatpush.msra.mxu0 %v541
    %1200 = vmatpush.msra.mxu0 %v533
    %1201 = vmatpush.msra.mxu0 %v525
    %1202 = vmatpush.msra.mxu0 %v517
    %1203 = vmatpush.msra.mxu0 %v509
    %1204 = vmatpush.msra.mxu0 %v501
    %1205 = vmatmul.f32.gmra.mxu0 %v495
    %v1206 = vpop.f32.mrf.mxu0
    %v1207 = vadd.f32 %v1015, %v1206
    %1208 = vdwg.mxu0
    %1209 = vmatpush.msra.mxu0 %v749
    %1210 = vmatpush.msra.mxu0 %v741
    %1211 = vmatpush.msra.mxu0 %v733
    %1212 = vmatpush.msra.mxu0 %v725
    %1213 = vmatpush.msra.mxu0 %v717
    %1214 = vmatpush.msra.mxu0 %v709
    %1215 = vmatpush.msra.mxu0 %v701
    %1216 = vmatpush.msra.mxu0 %v693
    %1217 = vmatpush.msra.mxu0 %v685
    %1218 = vmatpush.msra.mxu0 %v677
    %1219 = vmatpush.msra.mxu0 %v669
    %1220 = vmatpush.msra.mxu0 %v661
    %1221 = vmatpush.msra.mxu0 %v653
    %1222 = vmatpush.msra.mxu0 %v645
    %1223 = vmatpush.msra.mxu0 %v637
    %1224 = vmatpush.msra.mxu0 %v629
    %1225 = vmatmul.f32.gmra.mxu0 %v496
    %v1226 = vpop.f32.mrf.mxu0
    %v1227 = vadd.f32 %v1207, %v1226
    %1228 = vdwg.mxu0
    %1229 = vmatpush.msra.mxu0 %v877
    %1230 = vmatpush.msra.mxu0 %v869
    %1231 = vmatpush.msra.mxu0 %v861
    %1232 = vmatpush.msra.mxu0 %v853
    %1233 = vmatpush.msra.mxu0 %v845
    %1234 = vmatpush.msra.mxu0 %v837
    %1235 = vmatpush.msra.mxu0 %v829
    %1236 = vmatpush.msra.mxu0 %v821
    %1237 = vmatpush.msra.mxu0 %v813
    %1238 = vmatpush.msra.mxu0 %v805
    %1239 = vmatpush.msra.mxu0 %v797
    %1240 = vmatpush.msra.mxu0 %v789
    %1241 = vmatpush.msra.mxu0 %v781
    %1242 = vmatpush.msra.mxu0 %v773
    %1243 = vmatpush.msra.mxu0 %v765
    %1244 = vmatpush.msra.mxu0 %v757
    %1245 = vmatmul.f32.gmra.mxu0 %v497
    %v1246 = vpop.f32.mrf.mxu0
    %v1247 = vadd.f32 %v1227, %v1246
    %1248 = vdwg.mxu0
    %1249 = vmatpush.msra.mxu0 %v1005
    %1250 = vmatpush.msra.mxu0 %v997
    %1251 = vmatpush.msra.mxu0 %v989
    %1252 = vmatpush.msra.mxu0 %v981
    %1253 = vmatpush.msra.mxu0 %v973
    %1254 = vmatpush.msra.mxu0 %v965
    %1255 = vmatpush.msra.mxu0 %v957
    %1256 = vmatpush.msra.mxu0 %v949
    %1257 = vmatpush.msra.mxu0 %v941
    %1258 = vmatpush.msra.mxu0 %v933
    %1259 = vmatpush.msra.mxu0 %v925
    %1260 = vmatpush.msra.mxu0 %v917
    %1261 = vmatpush.msra.mxu0 %v909
    %1262 = vmatpush.msra.mxu0 %v901
    %1263 = vmatpush.msra.mxu0 %v893
    %1264 = vmatpush.msra.mxu0 %v885
    %1265 = vmatmul.f32.gmra.mxu0 %v498
    %v1266 = vpop.f32.mrf.mxu0
    %v1267 = vadd.f32 %v1247, %v1266
    %1268 = vdwg.mxu0
    %1269 = vmatpush.msra.mxu0 %v622
    %1270 = vmatpush.msra.mxu0 %v614
    %1271 = vmatpush.msra.mxu0 %v606
    %1272 = vmatpush.msra.mxu0 %v598
    %1273 = vmatpush.msra.mxu0 %v590
    %1274 = vmatpush.msra.mxu0 %v582
    %1275 = vmatpush.msra.mxu0 %v574
    %1276 = vmatpush.msra.mxu0 %v566
    %1277 = vmatpush.msra.mxu0 %v558
    %1278 = vmatpush.msra.mxu0 %v550
    %1279 = vmatpush.msra.mxu0 %v542
    %1280 = vmatpush.msra.mxu0 %v534
    %1281 = vmatpush.msra.mxu0 %v526
    %1282 = vmatpush.msra.mxu0 %v518
    %1283 = vmatpush.msra.mxu0 %v510
    %1284 = vmatpush.msra.mxu0 %v502
    %1285 = vmatmul.f32.gmra.mxu0 %v495
    %v1286 = vpop.f32.mrf.mxu0
    %v1287 = vadd.f32 %v1016, %v1286
    %1288 = vdwg.mxu0
    %1289 = vmatpush.msra.mxu0 %v750
    %1290 = vmatpush.msra.mxu0 %v742
    %1291 = vmatpush.msra.mxu0 %v734
    %1292 = vmatpush.msra.mxu0 %v726
    %1293 = vmatpush.msra.mxu0 %v718
    %1294 = vmatpush.msra.mxu0 %v710
    %1295 = vmatpush.msra.mxu0 %v702
    %1296 = vmatpush.msra.mxu0 %v694
    %1297 = vmatpush.msra.mxu0 %v686
    %1298 = vmatpush.msra.mxu0 %v678
    %1299 = vmatpush.msra.mxu0 %v670
    %1300 = vmatpush.msra.mxu0 %v662
    %1301 = vmatpush.msra.mxu0 %v654
    %1302 = vmatpush.msra.mxu0 %v646
    %1303 = vmatpush.msra.mxu0 %v638
    %1304 = vmatpush.msra.mxu0 %v630
    %1305 = vmatmul.f32.gmra.mxu0 %v496
    %v1306 = vpop.f32.mrf.mxu0
    %v1307 = vadd.f32 %v1287, %v1306
    %1308 = vdwg.mxu0
    %1309 = vmatpush.msra.mxu0 %v878
    %1310 = vmatpush.msra.mxu0 %v870
    %1311 = vmatpush.msra.mxu0 %v862
    %1312 = vmatpush.msra.mxu0 %v854
    %1313 = vmatpush.msra.mxu0 %v846
    %1314 = vmatpush.msra.mxu0 %v838
    %1315 = vmatpush.msra.mxu0 %v830
    %1316 = vmatpush.msra.mxu0 %v822
    %1317 = vmatpush.msra.mxu0 %v814
    %1318 = vmatpush.msra.mxu0 %v806
    %1319 = vmatpush.msra.mxu0 %v798
    %1320 = vmatpush.msra.mxu0 %v790
    %1321 = vmatpush.msra.mxu0 %v782
    %1322 = vmatpush.msra.mxu0 %v774
    %1323 = vmatpush.msra.mxu0 %v766
    %1324 = vmatpush.msra.mxu0 %v758
    %1325 = vmatmul.f32.gmra.mxu0 %v497
    %v1326 = vpop.f32.mrf.mxu0
    %v1327 = vadd.f32 %v1307, %v1326
    %1328 = vdwg.mxu0
    %1329 = vmatpush.msra.mxu0 %v1006
    %1330 = vmatpush.msra.mxu0 %v998
    %1331 = vmatpush.msra.mxu0 %v990
    %1332 = vmatpush.msra.mxu0 %v982
    %1333 = vmatpush.msra.mxu0 %v974
    %1334 = vmatpush.msra.mxu0 %v966
    %1335 = vmatpush.msra.mxu0 %v958
    %1336 = vmatpush.msra.mxu0 %v950
    %1337 = vmatpush.msra.mxu0 %v942
    %1338 = vmatpush.msra.mxu0 %v934
    %1339 = vmatpush.msra.mxu0 %v926
    %1340 = vmatpush.msra.mxu0 %v918
    %1341 = vmatpush.msra.mxu0 %v910
    %1342 = vmatpush.msra.mxu0 %v902
    %1343 = vmatpush.msra.mxu0 %v894
    %1344 = vmatpush.msra.mxu0 %v886
    %1345 = vmatmul.f32.gmra.mxu0 %v498
    %v1346 = vpop.f32.mrf.mxu0
    %v1347 = vadd.f32 %v1327, %v1346
    %1348 = vdwg.mxu0
    %1349 = vmatpush.msra.mxu0 %v623
    %1350 = vmatpush.msra.mxu0 %v615
    %1351 = vmatpush.msra.mxu0 %v607
    %1352 = vmatpush.msra.mxu0 %v599
    %1353 = vmatpush.msra.mxu0 %v591
    %1354 = vmatpush.msra.mxu0 %v583
    %1355 = vmatpush.msra.mxu0 %v575
    %1356 = vmatpush.msra.mxu0 %v567
    %1357 = vmatpush.msra.mxu0 %v559
    %1358 = vmatpush.msra.mxu0 %v551
    %1359 = vmatpush.msra.mxu0 %v543
    %1360 = vmatpush.msra.mxu0 %v535
    %1361 = vmatpush.msra.mxu0 %v527
    %1362 = vmatpush.msra.mxu0 %v519
    %1363 = vmatpush.msra.mxu0 %v511
    %1364 = vmatpush.msra.mxu0 %v503
    %1365 = vmatmul.f32.gmra.mxu0 %v495
    %v1366 = vpop.f32.mrf.mxu0
    %v1367 = vadd.f32 %v1017, %v1366
    %1368 = vdwg.mxu0
    %1369 = vmatpush.msra.mxu0 %v751
    %1370 = vmatpush.msra.mxu0 %v743
    %1371 = vmatpush.msra.mxu0 %v735
    %1372 = vmatpush.msra.mxu0 %v727
    %1373 = vmatpush.msra.mxu0 %v719
    %1374 = vmatpush.msra.mxu0 %v711
    %1375 = vmatpush.msra.mxu0 %v703
    %1376 = vmatpush.msra.mxu0 %v695
    %1377 = vmatpush.msra.mxu0 %v687
    %1378 = vmatpush.msra.mxu0 %v679
    %1379 = vmatpush.msra.mxu0 %v671
    %1380 = vmatpush.msra.mxu0 %v663
    %1381 = vmatpush.msra.mxu0 %v655
    %1382 = vmatpush.msra.mxu0 %v647
    %1383 = vmatpush.msra.mxu0 %v639
    %1384 = vmatpush.msra.mxu0 %v631
    %1385 = vmatmul.f32.gmra.mxu0 %v496
    %v1386 = vpop.f32.mrf.mxu0
    %v1387 = vadd.f32 %v1367, %v1386
    %1388 = vdwg.mxu0
    %1389 = vmatpush.msra.mxu0 %v879
    %1390 = vmatpush.msra.mxu0 %v871
    %1391 = vmatpush.msra.mxu0 %v863
    %1392 = vmatpush.msra.mxu0 %v855
    %1393 = vmatpush.msra.mxu0 %v847
    %1394 = vmatpush.msra.mxu0 %v839
    %1395 = vmatpush.msra.mxu0 %v831
    %1396 = vmatpush.msra.mxu0 %v823
    %1397 = vmatpush.msra.mxu0 %v815
    %1398 = vmatpush.msra.mxu0 %v807
    %1399 = vmatpush.msra.mxu0 %v799
    %1400 = vmatpush.msra.mxu0 %v791
    %1401 = vmatpush.msra.mxu0 %v783
    %1402 = vmatpush.msra.mxu0 %v775
    %1403 = vmatpush.msra.mxu0 %v767
    %1404 = vmatpush.msra.mxu0 %v759
    %1405 = vmatmul.f32.gmra.mxu0 %v497
    %v1406 = vpop.f32.mrf.mxu0
    %v1407 = vadd.f32 %v1387, %v1406
    %1408 = vdwg.mxu0
    %1409 = vmatpush.msra.mxu0 %v1007
    %1410 = vmatpush.msra.mxu0 %v999
    %1411 = vmatpush.msra.mxu0 %v991
    %1412 = vmatpush.msra.mxu0 %v983
    %1413 = vmatpush.msra.mxu0 %v975
    %1414 = vmatpush.msra.mxu0 %v967
    %1415 = vmatpush.msra.mxu0 %v959
    %1416 = vmatpush.msra.mxu0 %v951
    %1417 = vmatpush.msra.mxu0 %v943
    %1418 = vmatpush.msra.mxu0 %v935
    %1419 = vmatpush.msra.mxu0 %v927
    %1420 = vmatpush.msra.mxu0 %v919
    %1421 = vmatpush.msra.mxu0 %v911
    %1422 = vmatpush.msra.mxu0 %v903
    %1423 = vmatpush.msra.mxu0 %v895
    %1424 = vmatpush.msra.mxu0 %v887
    %1425 = vmatmul.f32.gmra.mxu0 %v498
    %v1426 = vpop.f32.mrf.mxu0
    %v1427 = vadd.f32 %v1407, %v1426
    %1428 = vdwg.mxu0
    %1429 = vmatpush.msra.mxu0 %v624
    %1430 = vmatpush.msra.mxu0 %v616
    %1431 = vmatpush.msra.mxu0 %v608
    %1432 = vmatpush.msra.mxu0 %v600
    %1433 = vmatpush.msra.mxu0 %v592
    %1434 = vmatpush.msra.mxu0 %v584
    %1435 = vmatpush.msra.mxu0 %v576
    %1436 = vmatpush.msra.mxu0 %v568
    %1437 = vmatpush.msra.mxu0 %v560
    %1438 = vmatpush.msra.mxu0 %v552
    %1439 = vmatpush.msra.mxu0 %v544
    %1440 = vmatpush.msra.mxu0 %v536
    %1441 = vmatpush.msra.mxu0 %v528
    %1442 = vmatpush.msra.mxu0 %v520
    %1443 = vmatpush.msra.mxu0 %v512
    %1444 = vmatpush.msra.mxu0 %v504
    %1445 = vmatmul.f32.gmra.mxu0 %v495
    %v1446 = vpop.f32.mrf.mxu0
    %v1447 = vadd.f32 %v1018, %v1446
    %1448 = vdwg.mxu0
    %1449 = vmatpush.msra.mxu0 %v752
    %1450 = vmatpush.msra.mxu0 %v744
    %1451 = vmatpush.msra.mxu0 %v736
    %1452 = vmatpush.msra.mxu0 %v728
    %1453 = vmatpush.msra.mxu0 %v720
    %1454 = vmatpush.msra.mxu0 %v712
    %1455 = vmatpush.msra.mxu0 %v704
    %1456 = vmatpush.msra.mxu0 %v696
    %1457 = vmatpush.msra.mxu0 %v688
    %1458 = vmatpush.msra.mxu0 %v680
    %1459 = vmatpush.msra.mxu0 %v672
    %1460 = vmatpush.msra.mxu0 %v664
    %1461 = vmatpush.msra.mxu0 %v656
    %1462 = vmatpush.msra.mxu0 %v648
    %1463 = vmatpush.msra.mxu0 %v640
    %1464 = vmatpush.msra.mxu0 %v632
    %1465 = vmatmul.f32.gmra.mxu0 %v496
    %v1466 = vpop.f32.mrf.mxu0
    %v1467 = vadd.f32 %v1447, %v1466
    %1468 = vdwg.mxu0
    %1469 = vmatpush.msra.mxu0 %v880
    %1470 = vmatpush.msra.mxu0 %v872
    %1471 = vmatpush.msra.mxu0 %v864
    %1472 = vmatpush.msra.mxu0 %v856
    %1473 = vmatpush.msra.mxu0 %v848
    %1474 = vmatpush.msra.mxu0 %v840
    %1475 = vmatpush.msra.mxu0 %v832
    %1476 = vmatpush.msra.mxu0 %v824
    %1477 = vmatpush.msra.mxu0 %v816
    %1478 = vmatpush.msra.mxu0 %v808
    %1479 = vmatpush.msra.mxu0 %v800
    %1480 = vmatpush.msra.mxu0 %v792
    %1481 = vmatpush.msra.mxu0 %v784
    %1482 = vmatpush.msra.mxu0 %v776
    %1483 = vmatpush.msra.mxu0 %v768
    %1484 = vmatpush.msra.mxu0 %v760
    %1485 = vmatmul.f32.gmra.mxu0 %v497
    %v1486 = vpop.f32.mrf.mxu0
    %v1487 = vadd.f32 %v1467, %v1486
    %1488 = vdwg.mxu0
    %1489 = vmatpush.msra.mxu0 %v1008
    %1490 = vmatpush.msra.mxu0 %v1000
    %1491 = vmatpush.msra.mxu0 %v992
    %1492 = vmatpush.msra.mxu0 %v984
    %1493 = vmatpush.msra.mxu0 %v976
    %1494 = vmatpush.msra.mxu0 %v968
    %1495 = vmatpush.msra.mxu0 %v960
    %1496 = vmatpush.msra.mxu0 %v952
    %1497 = vmatpush.msra.mxu0 %v944
    %1498 = vmatpush.msra.mxu0 %v936
    %1499 = vmatpush.msra.mxu0 %v928
    %1500 = vmatpush.msra.mxu0 %v920
    %1501 = vmatpush.msra.mxu0 %v912
    %1502 = vmatpush.msra.mxu0 %v904
    %1503 = vmatpush.msra.mxu0 %v896
    %1504 = vmatpush.msra.mxu0 %v888
    %1505 = vmatmul.f32.gmra.mxu0 %v498
    %v1506 = vpop.f32.mrf.mxu0
    %v1507 = vadd.f32 %v1487, %v1506
    %1508 = vdwg.mxu0
    %1509 = vmatpush.msra.mxu0 %v625
    %1510 = vmatpush.msra.mxu0 %v617
    %1511 = vmatpush.msra.mxu0 %v609
    %1512 = vmatpush.msra.mxu0 %v601
    %1513 = vmatpush.msra.mxu0 %v593
    %1514 = vmatpush.msra.mxu0 %v585
    %1515 = vmatpush.msra.mxu0 %v577
    %1516 = vmatpush.msra.mxu0 %v569
    %1517 = vmatpush.msra.mxu0 %v561
    %1518 = vmatpush.msra.mxu0 %v553
    %1519 = vmatpush.msra.mxu0 %v545
    %1520 = vmatpush.msra.mxu0 %v537
    %1521 = vmatpush.msra.mxu0 %v529
    %1522 = vmatpush.msra.mxu0 %v521
    %1523 = vmatpush.msra.mxu0 %v513
    %1524 = vmatpush.msra.mxu0 %v505
    %1525 = vmatmul.f32.gmra.mxu0 %v495
    %v1526 = vpop.f32.mrf.mxu0
    %v1527 = vadd.f32 %v1019, %v1526
    %1528 = vdwg.mxu0
    %1529 = vmatpush.msra.mxu0 %v753
    %1530 = vmatpush.msra.mxu0 %v745
    %1531 = vmatpush.msra.mxu0 %v737
    %1532 = vmatpush.msra.mxu0 %v729
    %1533 = vmatpush.msra.mxu0 %v721
    %1534 = vmatpush.msra.mxu0 %v713
    %1535 = vmatpush.msra.mxu0 %v705
    %1536 = vmatpush.msra.mxu0 %v697
    %1537 = vmatpush.msra.mxu0 %v689
    %1538 = vmatpush.msra.mxu0 %v681
    %1539 = vmatpush.msra.mxu0 %v673
    %1540 = vmatpush.msra.mxu0 %v665
    %1541 = vmatpush.msra.mxu0 %v657
    %1542 = vmatpush.msra.mxu0 %v649
    %1543 = vmatpush.msra.mxu0 %v641
    %1544 = vmatpush.msra.mxu0 %v633
    %1545 = vmatmul.f32.gmra.mxu0 %v496
    %v1546 = vpop.f32.mrf.mxu0
    %v1547 = vadd.f32 %v1527, %v1546
    %1548 = vdwg.mxu0
    %1549 = vmatpush.msra.mxu0 %v881
    %1550 = vmatpush.msra.mxu0 %v873
    %1551 = vmatpush.msra.mxu0 %v865
    %1552 = vmatpush.msra.mxu0 %v857
    %1553 = vmatpush.msra.mxu0 %v849
    %1554 = vmatpush.msra.mxu0 %v841
    %1555 = vmatpush.msra.mxu0 %v833
    %1556 = vmatpush.msra.mxu0 %v825
    %1557 = vmatpush.msra.mxu0 %v817
    %1558 = vmatpush.msra.mxu0 %v809
    %1559 = vmatpush.msra.mxu0 %v801
    %1560 = vmatpush.msra.mxu0 %v793
    %1561 = vmatpush.msra.mxu0 %v785
    %1562 = vmatpush.msra.mxu0 %v777
    %1563 = vmatpush.msra.mxu0 %v769
    %1564 = vmatpush.msra.mxu0 %v761
    %1565 = vmatmul.f32.gmra.mxu0 %v497
    %v1566 = vpop.f32.mrf.mxu0
    %v1567 = vadd.f32 %v1547, %v1566
    %1568 = vdwg.mxu0
    %1569 = vmatpush.msra.mxu0 %v1009
    %1570 = vmatpush.msra.mxu0 %v1001
    %1571 = vmatpush.msra.mxu0 %v993
    %1572 = vmatpush.msra.mxu0 %v985
    %1573 = vmatpush.msra.mxu0 %v977
    %1574 = vmatpush.msra.mxu0 %v969
    %1575 = vmatpush.msra.mxu0 %v961
    %1576 = vmatpush.msra.mxu0 %v953
    %1577 = vmatpush.msra.mxu0 %v945
    %1578 = vmatpush.msra.mxu0 %v937
    %1579 = vmatpush.msra.mxu0 %v929
    %1580 = vmatpush.msra.mxu0 %v921
    %1581 = vmatpush.msra.mxu0 %v913
    %1582 = vmatpush.msra.mxu0 %v905
    %1583 = vmatpush.msra.mxu0 %v897
    %1584 = vmatpush.msra.mxu0 %v889
    %1585 = vmatmul.f32.gmra.mxu0 %v498
    %v1586 = vpop.f32.mrf.mxu0
    %v1587 = vadd.f32 %v1567, %v1586
    %1588 = vdwg.mxu0
    %1589 = vmatpush.msra.mxu0 %v626
    %1590 = vmatpush.msra.mxu0 %v618
    %1591 = vmatpush.msra.mxu0 %v610
    %1592 = vmatpush.msra.mxu0 %v602
    %1593 = vmatpush.msra.mxu0 %v594
    %1594 = vmatpush.msra.mxu0 %v586
    %1595 = vmatpush.msra.mxu0 %v578
    %1596 = vmatpush.msra.mxu0 %v570
    %1597 = vmatpush.msra.mxu0 %v562
    %1598 = vmatpush.msra.mxu0 %v554
    %1599 = vmatpush.msra.mxu0 %v546
    %1600 = vmatpush.msra.mxu0 %v538
    %1601 = vmatpush.msra.mxu0 %v530
    %1602 = vmatpush.msra.mxu0 %v522
    %1603 = vmatpush.msra.mxu0 %v514
    %1604 = vmatpush.msra.mxu0 %v506
    %1605 = vmatmul.f32.gmra.mxu0 %v495
    %v1606 = vpop.f32.mrf.mxu0
    %v1607 = vadd.f32 %v1020, %v1606
    %1608 = vdwg.mxu0
    %1609 = vmatpush.msra.mxu0 %v754
    %1610 = vmatpush.msra.mxu0 %v746
    %1611 = vmatpush.msra.mxu0 %v738
    %1612 = vmatpush.msra.mxu0 %v730
    %1613 = vmatpush.msra.mxu0 %v722
    %1614 = vmatpush.msra.mxu0 %v714
    %1615 = vmatpush.msra.mxu0 %v706
    %1616 = vmatpush.msra.mxu0 %v698
    %1617 = vmatpush.msra.mxu0 %v690
    %1618 = vmatpush.msra.mxu0 %v682
    %1619 = vmatpush.msra.mxu0 %v674
    %1620 = vmatpush.msra.mxu0 %v666
    %1621 = vmatpush.msra.mxu0 %v658
    %1622 = vmatpush.msra.mxu0 %v650
    %1623 = vmatpush.msra.mxu0 %v642
    %1624 = vmatpush.msra.mxu0 %v634
    %1625 = vmatmul.f32.gmra.mxu0 %v496
    %v1626 = vpop.f32.mrf.mxu0
    %v1627 = vadd.f32 %v1607, %v1626
    %1628 = vdwg.mxu0
    %1629 = vmatpush.msra.mxu0 %v882
    %1630 = vmatpush.msra.mxu0 %v874
    %1631 = vmatpush.msra.mxu0 %v866
    %1632 = vmatpush.msra.mxu0 %v858
    %1633 = vmatpush.msra.mxu0 %v850
    %1634 = vmatpush.msra.mxu0 %v842
    %1635 = vmatpush.msra.mxu0 %v834
    %1636 = vmatpush.msra.mxu0 %v826
    %1637 = vmatpush.msra.mxu0 %v818
    %1638 = vmatpush.msra.mxu0 %v810
    %1639 = vmatpush.msra.mxu0 %v802
    %1640 = vmatpush.msra.mxu0 %v794
    %1641 = vmatpush.msra.mxu0 %v786
    %1642 = vmatpush.msra.mxu0 %v778
    %1643 = vmatpush.msra.mxu0 %v770
    %1644 = vmatpush.msra.mxu0 %v762
    %1645 = vmatmul.f32.gmra.mxu0 %v497
    %v1646 = vpop.f32.mrf.mxu0
    %v1647 = vadd.f32 %v1627, %v1646
    %1648 = vdwg.mxu0
    %1649 = vmatpush.msra.mxu0 %v1010
    %1650 = vmatpush.msra.mxu0 %v1002
    %1651 = vmatpush.msra.mxu0 %v994
    %1652 = vmatpush.msra.mxu0 %v986
    %1653 = vmatpush.msra.mxu0 %v978
    %1654 = vmatpush.msra.mxu0 %v970
    %1655 = vmatpush.msra.mxu0 %v962
    %1656 = vmatpush.msra.mxu0 %v954
    %1657 = vmatpush.msra.mxu0 %v946
    %1658 = vmatpush.msra.mxu0 %v938
    %1659 = vmatpush.msra.mxu0 %v930
    %1660 = vmatpush.msra.mxu0 %v922
    %1661 = vmatpush.msra.mxu0 %v914
    %1662 = vmatpush.msra.mxu0 %v906
    %1663 = vmatpush.msra.mxu0 %v898
    %1664 = vmatpush.msra.mxu0 %v890
    %1665 = vmatmul.f32.gmra.mxu0 %v498
    %v1666 = vpop.f32.mrf.mxu0
    %v1667 = vadd.f32 %v1647, %v1666
    %1668 = vdwg.mxu0
    %vm1669 = vcmp.ge.f32.partialorder %v1107, 0.0
    %vm1670 = vcmp.ge.f32.partialorder %v1187, 0.0
    %vm1671 = vcmp.ge.f32.partialorder %v1267, 0.0
    %vm1672 = vcmp.ge.f32.partialorder %v1347, 0.0
    %vm1673 = vcmp.ge.f32.partialorder %v1427, 0.0
    %vm1674 = vcmp.ge.f32.partialorder %v1507, 0.0
    %vm1675 = vcmp.ge.f32.partialorder %v1587, 0.0
    %vm1676 = vcmp.ge.f32.partialorder %v1667, 0.0
    %v1677 = vmul.f32 %v1107, 0.2
    %v1678 = vmul.f32 %v1187, 0.2
    %v1679 = vmul.f32 %v1267, 0.2
    %v1680 = vmul.f32 %v1347, 0.2
    %v1681 = vmul.f32 %v1427, 0.2
    %v1682 = vmul.f32 %v1507, 0.2
    %v1683 = vmul.f32 %v1587, 0.2
    %v1684 = vmul.f32 %v1667, 0.2
    %v1685 = vsel %vm1669, %v1107, %v1677
    %v1686 = vsel %vm1670, %v1187, %v1678
    %v1687 = vsel %vm1671, %v1267, %v1679
    %v1688 = vsel %vm1672, %v1347, %v1680
    %v1689 = vsel %vm1673, %v1427, %v1681
    %v1690 = vsel %vm1674, %v1507, %v1682
    %v1691 = vsel %vm1675, %v1587, %v1683
    %v1692 = vsel %vm1676, %v1667, %v1684
    %v1693 = vld [vmem:[#allocation22] sm:$0xff]
    %v1694 = vld [vmem:[#allocation22 + $0x8] sm:$0xff]
    %v1695 = vld [vmem:[#allocation22 + $0x10] sm:$0xff]
    %v1696 = vld [vmem:[#allocation22 + $0x18] sm:$0xff]
    %v1697 = vld [vmem:[#allocation22 + $0x20] sm:$0xff]
    %v1698 = vld [vmem:[#allocation22 + $0x28] sm:$0xff]
    %v1699 = vld [vmem:[#allocation22 + $0x30] sm:$0xff]
    %v1700 = vld [vmem:[#allocation22 + $0x38] sm:$0xff]
    %v1701 = vld [vmem:[#allocation22 + $0x40] sm:$0xff]
    %v1702 = vld [vmem:[#allocation22 + $0x48] sm:$0xff]
    %v1703 = vld [vmem:[#allocation22 + $0x50] sm:$0xff]
    %v1704 = vld [vmem:[#allocation22 + $0x58] sm:$0xff]
    %v1705 = vld [vmem:[#allocation22 + $0x60] sm:$0xff]
    %v1706 = vld [vmem:[#allocation22 + $0x68] sm:$0xff]
    %v1707 = vld [vmem:[#allocation22 + $0x70] sm:$0xff]
    %v1708 = vld [vmem:[#allocation22 + $0x78] sm:$0xff]
    %v1709 = vld [vmem:[#allocation22 + $0x80] sm:$0xff]
    %v1710 = vld [vmem:[#allocation22 + $0x88] sm:$0xff]
    %v1711 = vld [vmem:[#allocation22 + $0x90] sm:$0xff]
    %v1712 = vld [vmem:[#allocation22 + $0x98] sm:$0xff]
    %v1713 = vld [vmem:[#allocation22 + $0xa0] sm:$0xff]
    %v1714 = vld [vmem:[#allocation22 + $0xa8] sm:$0xff]
    %v1715 = vld [vmem:[#allocation22 + $0xb0] sm:$0xff]
    %v1716 = vld [vmem:[#allocation22 + $0xb8] sm:$0xff]
    %v1717 = vld [vmem:[#allocation22 + $0xc0] sm:$0xff]
    %v1718 = vld [vmem:[#allocation22 + $0xc8] sm:$0xff]
    %v1719 = vld [vmem:[#allocation22 + $0xd0] sm:$0xff]
    %v1720 = vld [vmem:[#allocation22 + $0xd8] sm:$0xff]
    %v1721 = vld [vmem:[#allocation22 + $0xe0] sm:$0xff]
    %v1722 = vld [vmem:[#allocation22 + $0xe8] sm:$0xff]
    %v1723 = vld [vmem:[#allocation22 + $0xf0] sm:$0xff]
    %v1724 = vld [vmem:[#allocation22 + $0xf8] sm:$0xff]
    %v1725 = vld [vmem:[#allocation22 + $0x100] sm:$0xff]
    %v1726 = vld [vmem:[#allocation22 + $0x108] sm:$0xff]
    %v1727 = vld [vmem:[#allocation22 + $0x110] sm:$0xff]
    %v1728 = vld [vmem:[#allocation22 + $0x118] sm:$0xff]
    %v1729 = vld [vmem:[#allocation22 + $0x120] sm:$0xff]
    %v1730 = vld [vmem:[#allocation22 + $0x128] sm:$0xff]
    %v1731 = vld [vmem:[#allocation22 + $0x130] sm:$0xff]
    %v1732 = vld [vmem:[#allocation22 + $0x138] sm:$0xff]
    %v1733 = vld [vmem:[#allocation22 + $0x140] sm:$0xff]
    %v1734 = vld [vmem:[#allocation22 + $0x148] sm:$0xff]
    %v1735 = vld [vmem:[#allocation22 + $0x150] sm:$0xff]
    %v1736 = vld [vmem:[#allocation22 + $0x158] sm:$0xff]
    %v1737 = vld [vmem:[#allocation22 + $0x160] sm:$0xff]
    %v1738 = vld [vmem:[#allocation22 + $0x168] sm:$0xff]
    %v1739 = vld [vmem:[#allocation22 + $0x170] sm:$0xff]
    %v1740 = vld [vmem:[#allocation22 + $0x178] sm:$0xff]
    %v1741 = vld [vmem:[#allocation22 + $0x180] sm:$0xff]
    %v1742 = vld [vmem:[#allocation22 + $0x188] sm:$0xff]
    %v1743 = vld [vmem:[#allocation22 + $0x190] sm:$0xff]
    %v1744 = vld [vmem:[#allocation22 + $0x198] sm:$0xff]
    %v1745 = vld [vmem:[#allocation22 + $0x1a0] sm:$0xff]
    %v1746 = vld [vmem:[#allocation22 + $0x1a8] sm:$0xff]
    %v1747 = vld [vmem:[#allocation22 + $0x1b0] sm:$0xff]
    %v1748 = vld [vmem:[#allocation22 + $0x1b8] sm:$0xff]
    %v1749 = vld [vmem:[#allocation22 + $0x1c0] sm:$0xff]
    %v1750 = vld [vmem:[#allocation22 + $0x1c8] sm:$0xff]
    %v1751 = vld [vmem:[#allocation22 + $0x1d0] sm:$0xff]
    %v1752 = vld [vmem:[#allocation22 + $0x1d8] sm:$0xff]
    %v1753 = vld [vmem:[#allocation22 + $0x1e0] sm:$0xff]
    %v1754 = vld [vmem:[#allocation22 + $0x1e8] sm:$0xff]
    %v1755 = vld [vmem:[#allocation22 + $0x1f0] sm:$0xff]
    %v1756 = vld [vmem:[#allocation22 + $0x1f8] sm:$0xff]
    %v1757 = vld [vmem:[#allocation22 + $0x200] sm:$0xff]
    %v1758 = vld [vmem:[#allocation22 + $0x208] sm:$0xff]
    %v1759 = vld [vmem:[#allocation22 + $0x210] sm:$0xff]
    %v1760 = vld [vmem:[#allocation22 + $0x218] sm:$0xff]
    %v1761 = vld [vmem:[#allocation22 + $0x220] sm:$0xff]
    %v1762 = vld [vmem:[#allocation22 + $0x228] sm:$0xff]
    %v1763 = vld [vmem:[#allocation22 + $0x230] sm:$0xff]
    %v1764 = vld [vmem:[#allocation22 + $0x238] sm:$0xff]
    %v1765 = vld [vmem:[#allocation22 + $0x240] sm:$0xff]
    %v1766 = vld [vmem:[#allocation22 + $0x248] sm:$0xff]
    %v1767 = vld [vmem:[#allocation22 + $0x250] sm:$0xff]
    %v1768 = vld [vmem:[#allocation22 + $0x258] sm:$0xff]
    %v1769 = vld [vmem:[#allocation22 + $0x260] sm:$0xff]
    %v1770 = vld [vmem:[#allocation22 + $0x268] sm:$0xff]
    %v1771 = vld [vmem:[#allocation22 + $0x270] sm:$0xff]
    %v1772 = vld [vmem:[#allocation22 + $0x278] sm:$0xff]
    %v1773 = vld [vmem:[#allocation22 + $0x280] sm:$0xff]
    %v1774 = vld [vmem:[#allocation22 + $0x288] sm:$0xff]
    %v1775 = vld [vmem:[#allocation22 + $0x290] sm:$0xff]
    %v1776 = vld [vmem:[#allocation22 + $0x298] sm:$0xff]
    %v1777 = vld [vmem:[#allocation22 + $0x2a0] sm:$0xff]
    %v1778 = vld [vmem:[#allocation22 + $0x2a8] sm:$0xff]
    %v1779 = vld [vmem:[#allocation22 + $0x2b0] sm:$0xff]
    %v1780 = vld [vmem:[#allocation22 + $0x2b8] sm:$0xff]
    %v1781 = vld [vmem:[#allocation22 + $0x2c0] sm:$0xff]
    %v1782 = vld [vmem:[#allocation22 + $0x2c8] sm:$0xff]
    %v1783 = vld [vmem:[#allocation22 + $0x2d0] sm:$0xff]
    %v1784 = vld [vmem:[#allocation22 + $0x2d8] sm:$0xff]
    %v1785 = vld [vmem:[#allocation22 + $0x2e0] sm:$0xff]
    %v1786 = vld [vmem:[#allocation22 + $0x2e8] sm:$0xff]
    %v1787 = vld [vmem:[#allocation22 + $0x2f0] sm:$0xff]
    %v1788 = vld [vmem:[#allocation22 + $0x2f8] sm:$0xff]
    %v1789 = vld [vmem:[#allocation22 + $0x300] sm:$0xff]
    %v1790 = vld [vmem:[#allocation22 + $0x308] sm:$0xff]
    %v1791 = vld [vmem:[#allocation22 + $0x310] sm:$0xff]
    %v1792 = vld [vmem:[#allocation22 + $0x318] sm:$0xff]
    %v1793 = vld [vmem:[#allocation22 + $0x320] sm:$0xff]
    %v1794 = vld [vmem:[#allocation22 + $0x328] sm:$0xff]
    %v1795 = vld [vmem:[#allocation22 + $0x330] sm:$0xff]
    %v1796 = vld [vmem:[#allocation22 + $0x338] sm:$0xff]
    %v1797 = vld [vmem:[#allocation22 + $0x340] sm:$0xff]
    %v1798 = vld [vmem:[#allocation22 + $0x348] sm:$0xff]
    %v1799 = vld [vmem:[#allocation22 + $0x350] sm:$0xff]
    %v1800 = vld [vmem:[#allocation22 + $0x358] sm:$0xff]
    %v1801 = vld [vmem:[#allocation22 + $0x360] sm:$0xff]
    %v1802 = vld [vmem:[#allocation22 + $0x368] sm:$0xff]
    %v1803 = vld [vmem:[#allocation22 + $0x370] sm:$0xff]
    %v1804 = vld [vmem:[#allocation22 + $0x378] sm:$0xff]
    %v1805 = vld [vmem:[#allocation22 + $0x380] sm:$0xff]
    %v1806 = vld [vmem:[#allocation22 + $0x388] sm:$0xff]
    %v1807 = vld [vmem:[#allocation22 + $0x390] sm:$0xff]
    %v1808 = vld [vmem:[#allocation22 + $0x398] sm:$0xff]
    %v1809 = vld [vmem:[#allocation22 + $0x3a0] sm:$0xff]
    %v1810 = vld [vmem:[#allocation22 + $0x3a8] sm:$0xff]
    %v1811 = vld [vmem:[#allocation22 + $0x3b0] sm:$0xff]
    %v1812 = vld [vmem:[#allocation22 + $0x3b8] sm:$0xff]
    %v1813 = vld [vmem:[#allocation22 + $0x3c0] sm:$0xff]
    %v1814 = vld [vmem:[#allocation22 + $0x3c8] sm:$0xff]
    %v1815 = vld [vmem:[#allocation22 + $0x3d0] sm:$0xff]
    %v1816 = vld [vmem:[#allocation22 + $0x3d8] sm:$0xff]
    %v1817 = vld [vmem:[#allocation22 + $0x3e0] sm:$0xff]
    %v1818 = vld [vmem:[#allocation22 + $0x3e8] sm:$0xff]
    %v1819 = vld [vmem:[#allocation22 + $0x3f0] sm:$0xff]
    %v1820 = vld [vmem:[#allocation22 + $0x3f8] sm:$0xff]
    %v1821 = vld [vmem:[#allocation22 + $0x400] sm:$0xff]
    %v1822 = vld [vmem:[#allocation22 + $0x408] sm:$0xff]
    %v1823 = vld [vmem:[#allocation22 + $0x410] sm:$0xff]
    %v1824 = vld [vmem:[#allocation22 + $0x418] sm:$0xff]
    %v1825 = vld [vmem:[#allocation22 + $0x420] sm:$0xff]
    %v1826 = vld [vmem:[#allocation22 + $0x428] sm:$0xff]
    %v1827 = vld [vmem:[#allocation22 + $0x430] sm:$0xff]
    %v1828 = vld [vmem:[#allocation22 + $0x438] sm:$0xff]
    %v1829 = vld [vmem:[#allocation22 + $0x440] sm:$0xff]
    %v1830 = vld [vmem:[#allocation22 + $0x448] sm:$0xff]
    %v1831 = vld [vmem:[#allocation22 + $0x450] sm:$0xff]
    %v1832 = vld [vmem:[#allocation22 + $0x458] sm:$0xff]
    %v1833 = vld [vmem:[#allocation22 + $0x460] sm:$0xff]
    %v1834 = vld [vmem:[#allocation22 + $0x468] sm:$0xff]
    %v1835 = vld [vmem:[#allocation22 + $0x470] sm:$0xff]
    %v1836 = vld [vmem:[#allocation22 + $0x478] sm:$0xff]
    %v1837 = vld [vmem:[#allocation22 + $0x480] sm:$0xff]
    %v1838 = vld [vmem:[#allocation22 + $0x488] sm:$0xff]
    %v1839 = vld [vmem:[#allocation22 + $0x490] sm:$0xff]
    %v1840 = vld [vmem:[#allocation22 + $0x498] sm:$0xff]
    %v1841 = vld [vmem:[#allocation22 + $0x4a0] sm:$0xff]
    %v1842 = vld [vmem:[#allocation22 + $0x4a8] sm:$0xff]
    %v1843 = vld [vmem:[#allocation22 + $0x4b0] sm:$0xff]
    %v1844 = vld [vmem:[#allocation22 + $0x4b8] sm:$0xff]
    %v1845 = vld [vmem:[#allocation22 + $0x4c0] sm:$0xff]
    %v1846 = vld [vmem:[#allocation22 + $0x4c8] sm:$0xff]
    %v1847 = vld [vmem:[#allocation22 + $0x4d0] sm:$0xff]
    %v1848 = vld [vmem:[#allocation22 + $0x4d8] sm:$0xff]
    %v1849 = vld [vmem:[#allocation22 + $0x4e0] sm:$0xff]
    %v1850 = vld [vmem:[#allocation22 + $0x4e8] sm:$0xff]
    %v1851 = vld [vmem:[#allocation22 + $0x4f0] sm:$0xff]
    %v1852 = vld [vmem:[#allocation22 + $0x4f8] sm:$0xff]
    %v1853 = vld [vmem:[#allocation22 + $0x500] sm:$0xff]
    %v1854 = vld [vmem:[#allocation22 + $0x508] sm:$0xff]
    %v1855 = vld [vmem:[#allocation22 + $0x510] sm:$0xff]
    %v1856 = vld [vmem:[#allocation22 + $0x518] sm:$0xff]
    %v1857 = vld [vmem:[#allocation22 + $0x520] sm:$0xff]
    %v1858 = vld [vmem:[#allocation22 + $0x528] sm:$0xff]
    %v1859 = vld [vmem:[#allocation22 + $0x530] sm:$0xff]
    %v1860 = vld [vmem:[#allocation22 + $0x538] sm:$0xff]
    %v1861 = vld [vmem:[#allocation22 + $0x540] sm:$0xff]
    %v1862 = vld [vmem:[#allocation22 + $0x548] sm:$0xff]
    %v1863 = vld [vmem:[#allocation22 + $0x550] sm:$0xff]
    %v1864 = vld [vmem:[#allocation22 + $0x558] sm:$0xff]
    %v1865 = vld [vmem:[#allocation22 + $0x560] sm:$0xff]
    %v1866 = vld [vmem:[#allocation22 + $0x568] sm:$0xff]
    %v1867 = vld [vmem:[#allocation22 + $0x570] sm:$0xff]
    %v1868 = vld [vmem:[#allocation22 + $0x578] sm:$0xff]
    %v1869 = vld [vmem:[#allocation22 + $0x580] sm:$0xff]
    %v1870 = vld [vmem:[#allocation22 + $0x588] sm:$0xff]
    %v1871 = vld [vmem:[#allocation22 + $0x590] sm:$0xff]
    %v1872 = vld [vmem:[#allocation22 + $0x598] sm:$0xff]
    %v1873 = vld [vmem:[#allocation22 + $0x5a0] sm:$0xff]
    %v1874 = vld [vmem:[#allocation22 + $0x5a8] sm:$0xff]
    %v1875 = vld [vmem:[#allocation22 + $0x5b0] sm:$0xff]
    %v1876 = vld [vmem:[#allocation22 + $0x5b8] sm:$0xff]
    %v1877 = vld [vmem:[#allocation22 + $0x5c0] sm:$0xff]
    %v1878 = vld [vmem:[#allocation22 + $0x5c8] sm:$0xff]
    %v1879 = vld [vmem:[#allocation22 + $0x5d0] sm:$0xff]
    %v1880 = vld [vmem:[#allocation22 + $0x5d8] sm:$0xff]
    %v1881 = vld [vmem:[#allocation22 + $0x5e0] sm:$0xff]
    %v1882 = vld [vmem:[#allocation22 + $0x5e8] sm:$0xff]
    %v1883 = vld [vmem:[#allocation22 + $0x5f0] sm:$0xff]
    %v1884 = vld [vmem:[#allocation22 + $0x5f8] sm:$0xff]
    %v1885 = vld [vmem:[#allocation22 + $0x600] sm:$0xff]
    %v1886 = vld [vmem:[#allocation22 + $0x608] sm:$0xff]
    %v1887 = vld [vmem:[#allocation22 + $0x610] sm:$0xff]
    %v1888 = vld [vmem:[#allocation22 + $0x618] sm:$0xff]
    %v1889 = vld [vmem:[#allocation22 + $0x620] sm:$0xff]
    %v1890 = vld [vmem:[#allocation22 + $0x628] sm:$0xff]
    %v1891 = vld [vmem:[#allocation22 + $0x630] sm:$0xff]
    %v1892 = vld [vmem:[#allocation22 + $0x638] sm:$0xff]
    %v1893 = vld [vmem:[#allocation22 + $0x640] sm:$0xff]
    %v1894 = vld [vmem:[#allocation22 + $0x648] sm:$0xff]
    %v1895 = vld [vmem:[#allocation22 + $0x650] sm:$0xff]
    %v1896 = vld [vmem:[#allocation22 + $0x658] sm:$0xff]
    %v1897 = vld [vmem:[#allocation22 + $0x660] sm:$0xff]
    %v1898 = vld [vmem:[#allocation22 + $0x668] sm:$0xff]
    %v1899 = vld [vmem:[#allocation22 + $0x670] sm:$0xff]
    %v1900 = vld [vmem:[#allocation22 + $0x678] sm:$0xff]
    %v1901 = vld [vmem:[#allocation22 + $0x680] sm:$0xff]
    %v1902 = vld [vmem:[#allocation22 + $0x688] sm:$0xff]
    %v1903 = vld [vmem:[#allocation22 + $0x690] sm:$0xff]
    %v1904 = vld [vmem:[#allocation22 + $0x698] sm:$0xff]
    %v1905 = vld [vmem:[#allocation22 + $0x6a0] sm:$0xff]
    %v1906 = vld [vmem:[#allocation22 + $0x6a8] sm:$0xff]
    %v1907 = vld [vmem:[#allocation22 + $0x6b0] sm:$0xff]
    %v1908 = vld [vmem:[#allocation22 + $0x6b8] sm:$0xff]
    %v1909 = vld [vmem:[#allocation22 + $0x6c0] sm:$0xff]
    %v1910 = vld [vmem:[#allocation22 + $0x6c8] sm:$0xff]
    %v1911 = vld [vmem:[#allocation22 + $0x6d0] sm:$0xff]
    %v1912 = vld [vmem:[#allocation22 + $0x6d8] sm:$0xff]
    %v1913 = vld [vmem:[#allocation22 + $0x6e0] sm:$0xff]
    %v1914 = vld [vmem:[#allocation22 + $0x6e8] sm:$0xff]
    %v1915 = vld [vmem:[#allocation22 + $0x6f0] sm:$0xff]
    %v1916 = vld [vmem:[#allocation22 + $0x6f8] sm:$0xff]
    %v1917 = vld [vmem:[#allocation22 + $0x700] sm:$0xff]
    %v1918 = vld [vmem:[#allocation22 + $0x708] sm:$0xff]
    %v1919 = vld [vmem:[#allocation22 + $0x710] sm:$0xff]
    %v1920 = vld [vmem:[#allocation22 + $0x718] sm:$0xff]
    %v1921 = vld [vmem:[#allocation22 + $0x720] sm:$0xff]
    %v1922 = vld [vmem:[#allocation22 + $0x728] sm:$0xff]
    %v1923 = vld [vmem:[#allocation22 + $0x730] sm:$0xff]
    %v1924 = vld [vmem:[#allocation22 + $0x738] sm:$0xff]
    %v1925 = vld [vmem:[#allocation22 + $0x740] sm:$0xff]
    %v1926 = vld [vmem:[#allocation22 + $0x748] sm:$0xff]
    %v1927 = vld [vmem:[#allocation22 + $0x750] sm:$0xff]
    %v1928 = vld [vmem:[#allocation22 + $0x758] sm:$0xff]
    %v1929 = vld [vmem:[#allocation22 + $0x760] sm:$0xff]
    %v1930 = vld [vmem:[#allocation22 + $0x768] sm:$0xff]
    %v1931 = vld [vmem:[#allocation22 + $0x770] sm:$0xff]
    %v1932 = vld [vmem:[#allocation22 + $0x778] sm:$0xff]
    %v1933 = vld [vmem:[#allocation22 + $0x780] sm:$0xff]
    %v1934 = vld [vmem:[#allocation22 + $0x788] sm:$0xff]
    %v1935 = vld [vmem:[#allocation22 + $0x790] sm:$0xff]
    %v1936 = vld [vmem:[#allocation22 + $0x798] sm:$0xff]
    %v1937 = vld [vmem:[#allocation22 + $0x7a0] sm:$0xff]
    %v1938 = vld [vmem:[#allocation22 + $0x7a8] sm:$0xff]
    %v1939 = vld [vmem:[#allocation22 + $0x7b0] sm:$0xff]
    %v1940 = vld [vmem:[#allocation22 + $0x7b8] sm:$0xff]
    %v1941 = vld [vmem:[#allocation22 + $0x7c0] sm:$0xff]
    %v1942 = vld [vmem:[#allocation22 + $0x7c8] sm:$0xff]
    %v1943 = vld [vmem:[#allocation22 + $0x7d0] sm:$0xff]
    %v1944 = vld [vmem:[#allocation22 + $0x7d8] sm:$0xff]
    %v1945 = vld [vmem:[#allocation22 + $0x7e0] sm:$0xff]
    %v1946 = vld [vmem:[#allocation22 + $0x7e8] sm:$0xff]
    %v1947 = vld [vmem:[#allocation22 + $0x7f0] sm:$0xff]
    %v1948 = vld [vmem:[#allocation22 + $0x7f8] sm:$0xff]
    %v1949 = vld [vmem:[#allocation23] sm:$0x3]
    %v1951 = vperm.slane %v1949, 0
    %v1952 = vperm.slane %v1949, 1
    %1955 = vmatpush.msra.mxu0 %v1723
    %1956 = vmatpush.msra.mxu0 %v1721
    %1957 = vmatpush.msra.mxu0 %v1719
    %1958 = vmatpush.msra.mxu0 %v1717
    %1959 = vmatpush.msra.mxu0 %v1715
    %1960 = vmatpush.msra.mxu0 %v1713
    %1961 = vmatpush.msra.mxu0 %v1711
    %1962 = vmatpush.msra.mxu0 %v1709
    %1963 = vmatpush.msra.mxu0 %v1707
    %1964 = vmatpush.msra.mxu0 %v1705
    %1965 = vmatpush.msra.mxu0 %v1703
    %1966 = vmatpush.msra.mxu0 %v1701
    %1967 = vmatpush.msra.mxu0 %v1699
    %1968 = vmatpush.msra.mxu0 %v1697
    %1969 = vmatpush.msra.mxu0 %v1695
    %1970 = vmatpush.msra.mxu0 %v1693
    %1971 = vmatmul.f32.gmra.mxu0 %v1685
    %v1972 = vpop.f32.mrf.mxu0
    %v1973 = vadd.f32 %v1951, %v1972
    %1974 = vdwg.mxu0
    %1975 = vmatpush.msra.mxu0 %v1755
    %1976 = vmatpush.msra.mxu0 %v1753
    %1977 = vmatpush.msra.mxu0 %v1751
    %1978 = vmatpush.msra.mxu0 %v1749
    %1979 = vmatpush.msra.mxu0 %v1747
    %1980 = vmatpush.msra.mxu0 %v1745
    %1981 = vmatpush.msra.mxu0 %v1743
    %1982 = vmatpush.msra.mxu0 %v1741
    %1983 = vmatpush.msra.mxu0 %v1739
    %1984 = vmatpush.msra.mxu0 %v1737
    %1985 = vmatpush.msra.mxu0 %v1735
    %1986 = vmatpush.msra.mxu0 %v1733
    %1987 = vmatpush.msra.mxu0 %v1731
    %1988 = vmatpush.msra.mxu0 %v1729
    %1989 = vmatpush.msra.mxu0 %v1727
    %1990 = vmatpush.msra.mxu0 %v1725
    %1991 = vmatmul.f32.gmra.mxu0 %v1686
    %v1992 = vpop.f32.mrf.mxu0
    %v1993 = vadd.f32 %v1973, %v1992
    %1994 = vdwg.mxu0
    %1995 = vmatpush.msra.mxu0 %v1787
    %1996 = vmatpush.msra.mxu0 %v1785
    %1997 = vmatpush.msra.mxu0 %v1783
    %1998 = vmatpush.msra.mxu0 %v1781
    %1999 = vmatpush.msra.mxu0 %v1779
    %2000 = vmatpush.msra.mxu0 %v1777
    %2001 = vmatpush.msra.mxu0 %v1775
    %2002 = vmatpush.msra.mxu0 %v1773
    %2003 = vmatpush.msra.mxu0 %v1771
    %2004 = vmatpush.msra.mxu0 %v1769
    %2005 = vmatpush.msra.mxu0 %v1767
    %2006 = vmatpush.msra.mxu0 %v1765
    %2007 = vmatpush.msra.mxu0 %v1763
    %2008 = vmatpush.msra.mxu0 %v1761
    %2009 = vmatpush.msra.mxu0 %v1759
    %2010 = vmatpush.msra.mxu0 %v1757
    %2011 = vmatmul.f32.gmra.mxu0 %v1687
    %v2012 = vpop.f32.mrf.mxu0
    %v2013 = vadd.f32 %v1993, %v2012
    %2014 = vdwg.mxu0
    %2015 = vmatpush.msra.mxu0 %v1819
    %2016 = vmatpush.msra.mxu0 %v1817
    %2017 = vmatpush.msra.mxu0 %v1815
    %2018 = vmatpush.msra.mxu0 %v1813
    %2019 = vmatpush.msra.mxu0 %v1811
    %2020 = vmatpush.msra.mxu0 %v1809
    %2021 = vmatpush.msra.mxu0 %v1807
    %2022 = vmatpush.msra.mxu0 %v1805
    %2023 = vmatpush.msra.mxu0 %v1803
    %2024 = vmatpush.msra.mxu0 %v1801
    %2025 = vmatpush.msra.mxu0 %v1799
    %2026 = vmatpush.msra.mxu0 %v1797
    %2027 = vmatpush.msra.mxu0 %v1795
    %2028 = vmatpush.msra.mxu0 %v1793
    %2029 = vmatpush.msra.mxu0 %v1791
    %2030 = vmatpush.msra.mxu0 %v1789
    %2031 = vmatmul.f32.gmra.mxu0 %v1688
    %v2032 = vpop.f32.mrf.mxu0
    %v2033 = vadd.f32 %v2013, %v2032
    %2034 = vdwg.mxu0
    %2035 = vmatpush.msra.mxu0 %v1851
    %2036 = vmatpush.msra.mxu0 %v1849
    %2037 = vmatpush.msra.mxu0 %v1847
    %2038 = vmatpush.msra.mxu0 %v1845
    %2039 = vmatpush.msra.mxu0 %v1843
    %2040 = vmatpush.msra.mxu0 %v1841
    %2041 = vmatpush.msra.mxu0 %v1839
    %2042 = vmatpush.msra.mxu0 %v1837
    %2043 = vmatpush.msra.mxu0 %v1835
    %2044 = vmatpush.msra.mxu0 %v1833
    %2045 = vmatpush.msra.mxu0 %v1831
    %2046 = vmatpush.msra.mxu0 %v1829
    %2047 = vmatpush.msra.mxu0 %v1827
    %2048 = vmatpush.msra.mxu0 %v1825
    %2049 = vmatpush.msra.mxu0 %v1823
    %2050 = vmatpush.msra.mxu0 %v1821
    %2051 = vmatmul.f32.gmra.mxu0 %v1689
    %v2052 = vpop.f32.mrf.mxu0
    %v2053 = vadd.f32 %v2033, %v2052
    %2054 = vdwg.mxu0
    %2055 = vmatpush.msra.mxu0 %v1883
    %2056 = vmatpush.msra.mxu0 %v1881
    %2057 = vmatpush.msra.mxu0 %v1879
    %2058 = vmatpush.msra.mxu0 %v1877
    %2059 = vmatpush.msra.mxu0 %v1875
    %2060 = vmatpush.msra.mxu0 %v1873
    %2061 = vmatpush.msra.mxu0 %v1871
    %2062 = vmatpush.msra.mxu0 %v1869
    %2063 = vmatpush.msra.mxu0 %v1867
    %2064 = vmatpush.msra.mxu0 %v1865
    %2065 = vmatpush.msra.mxu0 %v1863
    %2066 = vmatpush.msra.mxu0 %v1861
    %2067 = vmatpush.msra.mxu0 %v1859
    %2068 = vmatpush.msra.mxu0 %v1857
    %2069 = vmatpush.msra.mxu0 %v1855
    %2070 = vmatpush.msra.mxu0 %v1853
    %2071 = vmatmul.f32.gmra.mxu0 %v1690
    %v2072 = vpop.f32.mrf.mxu0
    %v2073 = vadd.f32 %v2053, %v2072
    %2074 = vdwg.mxu0
    %2075 = vmatpush.msra.mxu0 %v1915
    %2076 = vmatpush.msra.mxu0 %v1913
    %2077 = vmatpush.msra.mxu0 %v1911
    %2078 = vmatpush.msra.mxu0 %v1909
    %2079 = vmatpush.msra.mxu0 %v1907
    %2080 = vmatpush.msra.mxu0 %v1905
    %2081 = vmatpush.msra.mxu0 %v1903
    %2082 = vmatpush.msra.mxu0 %v1901
    %2083 = vmatpush.msra.mxu0 %v1899
    %2084 = vmatpush.msra.mxu0 %v1897
    %2085 = vmatpush.msra.mxu0 %v1895
    %2086 = vmatpush.msra.mxu0 %v1893
    %2087 = vmatpush.msra.mxu0 %v1891
    %2088 = vmatpush.msra.mxu0 %v1889
    %2089 = vmatpush.msra.mxu0 %v1887
    %2090 = vmatpush.msra.mxu0 %v1885
    %2091 = vmatmul.f32.gmra.mxu0 %v1691
    %v2092 = vpop.f32.mrf.mxu0
    %v2093 = vadd.f32 %v2073, %v2092
    %2094 = vdwg.mxu0
    %2095 = vmatpush.msra.mxu0 %v1947
    %2096 = vmatpush.msra.mxu0 %v1945
    %2097 = vmatpush.msra.mxu0 %v1943
    %2098 = vmatpush.msra.mxu0 %v1941
    %2099 = vmatpush.msra.mxu0 %v1939
    %2100 = vmatpush.msra.mxu0 %v1937
    %2101 = vmatpush.msra.mxu0 %v1935
    %2102 = vmatpush.msra.mxu0 %v1933
    %2103 = vmatpush.msra.mxu0 %v1931
    %2104 = vmatpush.msra.mxu0 %v1929
    %2105 = vmatpush.msra.mxu0 %v1927
    %2106 = vmatpush.msra.mxu0 %v1925
    %2107 = vmatpush.msra.mxu0 %v1923
    %2108 = vmatpush.msra.mxu0 %v1921
    %2109 = vmatpush.msra.mxu0 %v1919
    %2110 = vmatpush.msra.mxu0 %v1917
    %2111 = vmatmul.f32.gmra.mxu0 %v1692
    %v2112 = vpop.f32.mrf.mxu0
    %v2113 = vadd.f32 %v2093, %v2112
    %2114 = vdwg.mxu0
    %2115 = vmatpush.msra.mxu0 %v1724
    %2116 = vmatpush.msra.mxu0 %v1722
    %2117 = vmatpush.msra.mxu0 %v1720
    %2118 = vmatpush.msra.mxu0 %v1718
    %2119 = vmatpush.msra.mxu0 %v1716
    %2120 = vmatpush.msra.mxu0 %v1714
    %2121 = vmatpush.msra.mxu0 %v1712
    %2122 = vmatpush.msra.mxu0 %v1710
    %2123 = vmatpush.msra.mxu0 %v1708
    %2124 = vmatpush.msra.mxu0 %v1706
    %2125 = vmatpush.msra.mxu0 %v1704
    %2126 = vmatpush.msra.mxu0 %v1702
    %2127 = vmatpush.msra.mxu0 %v1700
    %2128 = vmatpush.msra.mxu0 %v1698
    %2129 = vmatpush.msra.mxu0 %v1696
    %2130 = vmatpush.msra.mxu0 %v1694
    %2131 = vmatmul.f32.gmra.mxu0 %v1685
    %v2132 = vpop.f32.mrf.mxu0
    %v2133 = vadd.f32 %v1952, %v2132
    %2134 = vdwg.mxu0
    %2135 = vmatpush.msra.mxu0 %v1756
    %2136 = vmatpush.msra.mxu0 %v1754
    %2137 = vmatpush.msra.mxu0 %v1752
    %2138 = vmatpush.msra.mxu0 %v1750
    %2139 = vmatpush.msra.mxu0 %v1748
    %2140 = vmatpush.msra.mxu0 %v1746
    %2141 = vmatpush.msra.mxu0 %v1744
    %2142 = vmatpush.msra.mxu0 %v1742
    %2143 = vmatpush.msra.mxu0 %v1740
    %2144 = vmatpush.msra.mxu0 %v1738
    %2145 = vmatpush.msra.mxu0 %v1736
    %2146 = vmatpush.msra.mxu0 %v1734
    %2147 = vmatpush.msra.mxu0 %v1732
    %2148 = vmatpush.msra.mxu0 %v1730
    %2149 = vmatpush.msra.mxu0 %v1728
    %2150 = vmatpush.msra.mxu0 %v1726
    %2151 = vmatmul.f32.gmra.mxu0 %v1686
    %v2152 = vpop.f32.mrf.mxu0
    %v2153 = vadd.f32 %v2133, %v2152
    %2154 = vdwg.mxu0
    %2155 = vmatpush.msra.mxu0 %v1788
    %2156 = vmatpush.msra.mxu0 %v1786
    %2157 = vmatpush.msra.mxu0 %v1784
    %2158 = vmatpush.msra.mxu0 %v1782
    %2159 = vmatpush.msra.mxu0 %v1780
    %2160 = vmatpush.msra.mxu0 %v1778
    %2161 = vmatpush.msra.mxu0 %v1776
    %2162 = vmatpush.msra.mxu0 %v1774
    %2163 = vmatpush.msra.mxu0 %v1772
    %2164 = vmatpush.msra.mxu0 %v1770
    %2165 = vmatpush.msra.mxu0 %v1768
    %2166 = vmatpush.msra.mxu0 %v1766
    %2167 = vmatpush.msra.mxu0 %v1764
    %2168 = vmatpush.msra.mxu0 %v1762
    %2169 = vmatpush.msra.mxu0 %v1760
    %2170 = vmatpush.msra.mxu0 %v1758
    %2171 = vmatmul.f32.gmra.mxu0 %v1687
    %v2172 = vpop.f32.mrf.mxu0
    %v2173 = vadd.f32 %v2153, %v2172
    %2174 = vdwg.mxu0
    %2175 = vmatpush.msra.mxu0 %v1820
    %2176 = vmatpush.msra.mxu0 %v1818
    %2177 = vmatpush.msra.mxu0 %v1816
    %2178 = vmatpush.msra.mxu0 %v1814
    %2179 = vmatpush.msra.mxu0 %v1812
    %2180 = vmatpush.msra.mxu0 %v1810
    %2181 = vmatpush.msra.mxu0 %v1808
    %2182 = vmatpush.msra.mxu0 %v1806
    %2183 = vmatpush.msra.mxu0 %v1804
    %2184 = vmatpush.msra.mxu0 %v1802
    %2185 = vmatpush.msra.mxu0 %v1800
    %2186 = vmatpush.msra.mxu0 %v1798
    %2187 = vmatpush.msra.mxu0 %v1796
    %2188 = vmatpush.msra.mxu0 %v1794
    %2189 = vmatpush.msra.mxu0 %v1792
    %2190 = vmatpush.msra.mxu0 %v1790
    %2191 = vmatmul.f32.gmra.mxu0 %v1688
    %v2192 = vpop.f32.mrf.mxu0
    %v2193 = vadd.f32 %v2173, %v2192
    %2194 = vdwg.mxu0
    %2195 = vmatpush.msra.mxu0 %v1852
    %2196 = vmatpush.msra.mxu0 %v1850
    %2197 = vmatpush.msra.mxu0 %v1848
    %2198 = vmatpush.msra.mxu0 %v1846
    %2199 = vmatpush.msra.mxu0 %v1844
    %2200 = vmatpush.msra.mxu0 %v1842
    %2201 = vmatpush.msra.mxu0 %v1840
    %2202 = vmatpush.msra.mxu0 %v1838
    %2203 = vmatpush.msra.mxu0 %v1836
    %2204 = vmatpush.msra.mxu0 %v1834
    %2205 = vmatpush.msra.mxu0 %v1832
    %2206 = vmatpush.msra.mxu0 %v1830
    %2207 = vmatpush.msra.mxu0 %v1828
    %2208 = vmatpush.msra.mxu0 %v1826
    %2209 = vmatpush.msra.mxu0 %v1824
    %2210 = vmatpush.msra.mxu0 %v1822
    %2211 = vmatmul.f32.gmra.mxu0 %v1689
    %v2212 = vpop.f32.mrf.mxu0
    %v2213 = vadd.f32 %v2193, %v2212
    %2214 = vdwg.mxu0
    %2215 = vmatpush.msra.mxu0 %v1884
    %2216 = vmatpush.msra.mxu0 %v1882
    %2217 = vmatpush.msra.mxu0 %v1880
    %2218 = vmatpush.msra.mxu0 %v1878
    %2219 = vmatpush.msra.mxu0 %v1876
    %2220 = vmatpush.msra.mxu0 %v1874
    %2221 = vmatpush.msra.mxu0 %v1872
    %2222 = vmatpush.msra.mxu0 %v1870
    %2223 = vmatpush.msra.mxu0 %v1868
    %2224 = vmatpush.msra.mxu0 %v1866
    %2225 = vmatpush.msra.mxu0 %v1864
    %2226 = vmatpush.msra.mxu0 %v1862
    %2227 = vmatpush.msra.mxu0 %v1860
    %2228 = vmatpush.msra.mxu0 %v1858
    %2229 = vmatpush.msra.mxu0 %v1856
    %2230 = vmatpush.msra.mxu0 %v1854
    %2231 = vmatmul.f32.gmra.mxu0 %v1690
    %v2232 = vpop.f32.mrf.mxu0
    %v2233 = vadd.f32 %v2213, %v2232
    %2234 = vdwg.mxu0
    %2235 = vmatpush.msra.mxu0 %v1916
    %2236 = vmatpush.msra.mxu0 %v1914
    %2237 = vmatpush.msra.mxu0 %v1912
    %2238 = vmatpush.msra.mxu0 %v1910
    %2239 = vmatpush.msra.mxu0 %v1908
    %2240 = vmatpush.msra.mxu0 %v1906
    %2241 = vmatpush.msra.mxu0 %v1904
    %2242 = vmatpush.msra.mxu0 %v1902
    %2243 = vmatpush.msra.mxu0 %v1900
    %2244 = vmatpush.msra.mxu0 %v1898
    %2245 = vmatpush.msra.mxu0 %v1896
    %2246 = vmatpush.msra.mxu0 %v1894
    %2247 = vmatpush.msra.mxu0 %v1892
    %2248 = vmatpush.msra.mxu0 %v1890
    %2249 = vmatpush.msra.mxu0 %v1888
    %2250 = vmatpush.msra.mxu0 %v1886
    %2251 = vmatmul.f32.gmra.mxu0 %v1691
    %v2252 = vpop.f32.mrf.mxu0
    %v2253 = vadd.f32 %v2233, %v2252
    %2254 = vdwg.mxu0
    %2255 = vmatpush.msra.mxu0 %v1948
    %2256 = vmatpush.msra.mxu0 %v1946
    %2257 = vmatpush.msra.mxu0 %v1944
    %2258 = vmatpush.msra.mxu0 %v1942
    %2259 = vmatpush.msra.mxu0 %v1940
    %2260 = vmatpush.msra.mxu0 %v1938
    %2261 = vmatpush.msra.mxu0 %v1936
    %2262 = vmatpush.msra.mxu0 %v1934
    %2263 = vmatpush.msra.mxu0 %v1932
    %2264 = vmatpush.msra.mxu0 %v1930
    %2265 = vmatpush.msra.mxu0 %v1928
    %2266 = vmatpush.msra.mxu0 %v1926
    %2267 = vmatpush.msra.mxu0 %v1924
    %2268 = vmatpush.msra.mxu0 %v1922
    %2269 = vmatpush.msra.mxu0 %v1920
    %2270 = vmatpush.msra.mxu0 %v1918
    %2271 = vmatmul.f32.gmra.mxu0 %v1692
    %v2272 = vpop.f32.mrf.mxu0
    %v2273 = vadd.f32 %v2253, %v2272
    %2274 = vdwg.mxu0
    %vm2275 = vcmask 1041408
    %v2276 = vsel %vm2275, %v2113, -inf
    %v2277 = vsel %vm2275, %v2273, -inf
    %v2278 = vmax.f32 %v2276, %v2277
    %2279 = vmax.xlane.f32.xlu0 %v2278
    %v2280 = vpop.xlane.xlu0 %2279
    %v2281 = vsub.f32 %v2113, %v2280
    %v2282 = vsub.f32 %v2273, %v2280
    %v2283 = vmul.f32 %v2281, 1.442695
    %v2284 = vpow.pop %v2283
    %v2285 = vmul.f32 %v2282, 1.442695
    %v2286 = vpow.pop %v2285
    %v2287 = vsel %vm2275, %v2284, 0.0
    %v2288 = vsel %vm2275, %v2286, 0.0
    %v2289 = vadd.f32 %v2287, %v2288
    %2290 = vadd.xlane.f32.xlu0 %v2289
    %v2291 = vpop.xlane.xlu0 %2290
    %v2292 = vlog2.pop %v2291
    %v2293 = vmul.f32 %v2292, 0.6931472
    %v2294 = vsub.f32 %v2281, %v2293
    %v2295 = vsub.f32 %v2282, %v2293
    %v2298 = vrot.slane %v2295, 6
    %v2299 = vsel %vm2275, %v2294, %v2298
    %2301 = vst [vmem:[#allocation25] sm:$0xf] %v2299
    // Predicated region
    $region118: #{tpu_custom_call.1} parent=1 // pred_check
      _
    $region119: #{tpu_custom_call.1} parent=1 // pred_check_branch
      %2303 = sbr.rel (0) target = $region121
    $region120: #{tpu_custom_call.1} parent=1 // pred_region
      %2305 = vsyncadd [#allocation4], 0
      %s2307 = sshll.u32 [#allocation25], 4
      %s2308 = int_to_ptr.vmem [resolvable:$true] %s2307
      %s2309 = sshll.u32 %s15, 4
      %s2310 = int_to_ptr.hbm [resolvable:$true] %s2309
      %2312 = dma.vmem_to_hbm [thread:$0]  %s2308, 64, %s2310, [#allocation4]
    $region121: #{tpu_custom_call.1} parent=1 // pred_fallthru
      _
    // Predicated region
    $region122: #{tpu_custom_call.1} parent=1 // pred_check
      _
    $region123: #{tpu_custom_call.1} parent=1 // pred_check_branch
      %2314 = sbr.rel (0) target = $region125
    $region124: #{tpu_custom_call.1} parent=1 // pred_region
      %2316 = dma.done [#allocation4], 64
    $region125: #{tpu_custom_call.1} parent=1 // pred_fallthru
      _
    %2317 = vsyncpa [#allocation3], 1
    %2318 = vsyncpa [#allocation6], 1
    %2319 = vsyncpa [#allocation9], 1
    %2320 = vsyncpa [#allocation12], 1
    %2321 = vsyncpa [#allocation15], 1
    %2322 = vsyncpa [#allocation18], 1
    %2323 = vsyncpa [#allocation21], 1
    %2324 = vsyncpa [#allocation24], 1
    %2325 = vsyncpa [#allocation4], 1

</llo_original>
